<compile_context>
chip_gen: v7x
topology: tpu7x:2x2x1
jax: 0.10.0
libtpu: 0.0.40
codegen_flags: <defaults>
</compile_context>

<pallas_src>
import math

import jax
import jax.numpy as jnp
from jax.experimental import pallas as pl
from jax.experimental.pallas import tpu as pltpu  # noqa: F401  (imported per template)

# Small, module-consistent shapes
B, S, D, H, DFF = 2, 8, 32, 4, 64
DK = D // H
BS = B * S
EPS = 1e-6
NEG_INF = -1e9


def _layernorm(x, gamma, beta):
    # Matches the custom torch LayerNormalization: UNBIASED std (divide by N-1) and
    # eps added to std (not to the variance).  Exact reciprocal to keep these semantics.
    mean = jnp.mean(x, axis=-1, keepdims=True)
    d = x - mean
    var = jnp.sum(d * d, axis=-1, keepdims=True) * (1.0 / (x.shape[-1] - 1))
    inv = pl.reciprocal(jnp.sqrt(var) + EPS, approx=False)
    return gamma * d * inv + beta


def encoder_block_kernel(x_ref, bias_ref, wbig_ref, w1_ref, w2_ref, vec_ref, o_ref):
    x = x_ref[...]                              # (B*S, D) — whole batch, single program

    # Unpack the small-parameter slab (static lane slices of one (2,128) vreg-width load).
    vecs = vec_ref[...]
    g1, be1 = vecs[0:1, 0:D], vecs[0:1, D:2 * D]
    g2, be2 = vecs[0:1, 2 * D:3 * D], vecs[0:1, 3 * D:4 * D]
    b1 = vecs[1:2, 0:DFF]
    b2 = vecs[1:2, DFF:DFF + D]

    # Packed weight slab: [ Wq/sqrt(dk) | Wk | Wv | Wo ]  -> (D, 4D) = (32, 128).
    wbig = wbig_ref[...]
    wqkv = wbig[:, 0:3 * D]
    wo = wbig[:, 3 * D:4 * D]

    # ---------------- residual connection 0: pre-norm self-attention ----------------
    y = _layernorm(x, g1, be1)                                                 # (BS, D)

    # Fused QKV projection: one (BS, D) @ (D, 3D) MXU op; Q already carries 1/sqrt(dk).
    qkv = jnp.dot(y, wqkv, preferred_element_type=jnp.float32)                 # (BS, 3D)
    q3 = qkv[:, 0:D].reshape(B, S, D)
    k3 = qkv[:, D:2 * D].reshape(B, S, D)
    v3 = qkv[:, 2 * D:3 * D].reshape(B, S, D)

    # Additive key-mask bias, broadcast ONCE (hoisted out of the unrolled head loop).
    bias_bss = jnp.broadcast_to(bias_ref[...][:, None, :], (B, S, S))

    pv_heads = []
    for hi in range(H):                         # static head loop, batched over B
        lo = hi * DK
        qh = q3[:, :, lo:lo + DK]
        kh = k3[:, :, lo:lo + DK]
        vh = v3[:, :, lo:lo + DK]

        s = jnp.einsum('bqd,bkd->bqk', qh, kh,
                       preferred_element_type=jnp.float32)                     # (B, S, S)
        s = s + bias_bss                                                       # masked keys -> -1e9
        s = s - jnp.max(s, axis=-1, keepdims=True)
        p = jnp.exp(s)
        # EUP approximate reciprocal for the softmax denominator (perf review item).
        p = p * pl.reciprocal(jnp.sum(p, axis=-1, keepdims=True), approx=True)

        pv_heads.append(jnp.einsum('bqk,bkd->bqd', p, vh,
                                   preferred_element_type=jnp.float32))        # (B, S, DK)

    # Lane-concat the heads once, then a single fused Wo matmul (one MXU drain).
    pv = jnp.concatenate(pv_heads, axis=-1).reshape(BS, D)
    attn = jnp.dot(pv, wo, preferred_element_type=jnp.float32)

    # TODO(synk): dropout layers are identity here (inference semantics).
    x1 = x + attn

    # ---------------- residual connection 1: pre-norm feed-forward ------------------
    y2 = _layernorm(x1, g2, be2)
    hdn = jnp.maximum(
        jnp.dot(y2, w1_ref[...], preferred_element_type=jnp.float32) + b1, 0.0)
    ff = jnp.dot(hdn, w2_ref[...], preferred_element_type=jnp.float32) + b2
    o_ref[...] = x1 + ff


# --------------------- one-time (offline) parameter / mask packing ---------------------
def prepare_params(params):
    """Pack weights once at parameter-prep time (NOT in the per-call jit path)."""
    (wq, wk, wv, wo, w1, b1, w2, b2, g1, be1, g2, be2) = params
    scale = 1.0 / math.sqrt(DK)
    # [ Wq*scale | Wk | Wv | Wo ] -> (D, 4D) = (32, 128): lane-dense single weight slab.
    wbig = jnp.concatenate([wq * scale, wk, wv, wo], axis=1).astype(jnp.float32)
    # Six tiny vectors packed into one (2, 128) slab.
    vecs = jnp.zeros((2, 4 * D), dtype=jnp.float32)
    vecs = vecs.at[0, 0:D].set(g1.reshape(-1))
    vecs = vecs.at[0, D:2 * D].set(be1.reshape(-1))
    vecs = vecs.at[0, 2 * D:3 * D].set(g2.reshape(-1))
    vecs = vecs.at[0, 3 * D:4 * D].set(be2.reshape(-1))
    vecs = vecs.at[1, 0:DFF].set(b1.reshape(-1))
    vecs = vecs.at[1, DFF:DFF + D].set(b2.reshape(-1))
    return (wbig, w1.astype(jnp.float32), w2.astype(jnp.float32), vecs)


def prepare_mask(mask):
    """0/1 key mask -> additive -1e9 bias, computed once outside the jitted call."""
    return jnp.where(mask == 0.0, NEG_INF, 0.0).astype(jnp.float32)


@jax.jit
def encoder_block(x, bias, wbig, w1, w2, vecs):
    x2d = x.reshape(BS, D)
    out = pl.pallas_call(
        encoder_block_kernel,
        out_shape=jax.ShapeDtypeStruct((BS, D), jnp.float32),
        # No grid: ~30 KB of operands fit trivially in VMEM as full-array blocks; a grid
        # would only add per-step overhead at this size.  (Add a "parallel" row-block
        # grid axis only together with batching >=128/256 rows per call.)
    )(x2d, bias, wbig, w1, w2, vecs)
    return out.reshape(B, S, D)


# ------------------------------- pure-JAX reference -------------------------------
def reference(x, mask, params):
    (wq, wk, wv, wo, w1, b1, w2, b2, g1, be1, g2, be2) = params

    def ln(t, g, b):
        mean = jnp.mean(t, axis=-1, keepdims=True)
        var = jnp.sum((t - mean) ** 2, axis=-1, keepdims=True) / (t.shape[-1] - 1)
        return g * (t - mean) / (jnp.sqrt(var) + EPS) + b

    y = ln(x, g1, be1)
    q = (y @ wq).reshape(B, S, H, DK).transpose(0, 2, 1, 3)
    k = (y @ wk).reshape(B, S, H, DK).transpose(0, 2, 1, 3)
    v = (y @ wv).reshape(B, S, H, DK).transpose(0, 2, 1, 3)
    s = q @ k.transpose(0, 1, 3, 2) / math.sqrt(DK)                # (B,H,S,S)
    s = jnp.where(mask[:, None, None, :] == 0.0, -1e9, s)
    p = jax.nn.softmax(s, axis=-1)
    a = (p @ v).transpose(0, 2, 1, 3).reshape(B, S, D) @ wo
    x1 = x + a
    y2 = ln(x1, g2, be2)
    ff = jnp.maximum(y2 @ w1 + b1, 0.0) @ w2 + b2
    return x1 + ff


if __name__ == "__main__":
    key = jax.random.PRNGKey(0)
    ks = jax.random.split(key, 8)

    x = jax.random.normal(ks[0], (B, S, D), dtype=jnp.float32)
    mask = jnp.ones((B, S), dtype=jnp.float32).at[1, -2:].set(0.0)   # mask last 2 keys of batch 1

    wq = 0.05 * jax.random.normal(ks[1], (D, D), dtype=jnp.float32)
    wk = 0.05 * jax.random.normal(ks[2], (D, D), dtype=jnp.float32)
    wv = 0.05 * jax.random.normal(ks[3], (D, D), dtype=jnp.float32)
    wo = 0.05 * jax.random.normal(ks[4], (D, D), dtype=jnp.float32)
    w1 = 0.05 * jax.random.normal(ks[5], (D, DFF), dtype=jnp.float32)
    b1 = 0.01 * jnp.ones((1, DFF), dtype=jnp.float32)
    w2 = 0.05 * jax.random.normal(ks[6], (DFF, D), dtype=jnp.float32)
    b2 = 0.01 * jnp.ones((1, D), dtype=jnp.float32)
    g1 = jnp.ones((1, D), dtype=jnp.float32)
    be1 = jnp.zeros((1, D), dtype=jnp.float32)
    g2 = jnp.ones((1, D), dtype=jnp.float32)
    be2 = jnp.zeros((1, D), dtype=jnp.float32)

    params = (wq, wk, wv, wo, w1, b1, w2, b2, g1, be1, g2, be2)

    # Offline packing: weight slab + vector slab + mask bias computed once, outside jit.
    packed = prepare_params(params)
    bias = prepare_mask(mask)

    out = encoder_block(x, bias, *packed)
    out = jax.block_until_ready(out)

    ref = reference(x, mask, params)
    assert out.shape == (B, S, D)
    # Tolerance relaxed slightly from 1e-4 to give headroom for the approximate EUP
    # reciprocal now used in the softmax denominator (all matmuls remain f32).
    assert jnp.allclose(out, ref, atol=2e-4, rtol=2e-4), "mismatch vs pure-JAX reference"
    print("KERNEL_OK")
</pallas_src>

<mosaic_0001>
module attributes {stable_mosaic.version = 11 : i64} {
  func.func @encoder_block_kernel(%arg0: memref<16x32xf32, #tpu.memory_space<vmem>>, %arg1: memref<2x8xf32, #tpu.memory_space<vmem>>, %arg2: memref<32x128xf32, #tpu.memory_space<vmem>>, %arg3: memref<32x64xf32, #tpu.memory_space<vmem>>, %arg4: memref<64x32xf32, #tpu.memory_space<vmem>>, %arg5: memref<2x128xf32, #tpu.memory_space<vmem>>, %arg6: memref<16x32xf32, #tpu.memory_space<vmem>>) attributes {dimension_semantics = [], scalar_prefetch = 0 : i64, scratch_operands = 0 : i64, tpu.core_type = #tpu.core_type<tc>} {
    %c0 = arith.constant 0 : index
    %c0_0 = arith.constant 0 : index
    %0 = vector.load %arg0[%c0, %c0_0] : memref<16x32xf32, #tpu.memory_space<vmem>>, vector<16x32xf32>
    %c0_1 = arith.constant 0 : index
    %c0_2 = arith.constant 0 : index
    %1 = vector.load %arg5[%c0_1, %c0_2] : memref<2x128xf32, #tpu.memory_space<vmem>>, vector<2x128xf32>
    %2 = vector.extract_strided_slice %1 {offsets = [0, 0], sizes = [1, 32], strides = [1, 1]} : vector<2x128xf32> to vector<1x32xf32>
    %3 = vector.extract_strided_slice %1 {offsets = [0, 32], sizes = [1, 32], strides = [1, 1]} : vector<2x128xf32> to vector<1x32xf32>
    %4 = vector.extract_strided_slice %1 {offsets = [0, 64], sizes = [1, 32], strides = [1, 1]} : vector<2x128xf32> to vector<1x32xf32>
    %5 = vector.extract_strided_slice %1 {offsets = [0, 96], sizes = [1, 32], strides = [1, 1]} : vector<2x128xf32> to vector<1x32xf32>
    %6 = vector.extract_strided_slice %1 {offsets = [1, 0], sizes = [1, 64], strides = [1, 1]} : vector<2x128xf32> to vector<1x64xf32>
    %7 = vector.extract_strided_slice %1 {offsets = [1, 64], sizes = [1, 32], strides = [1, 1]} : vector<2x128xf32> to vector<1x32xf32>
    %c0_3 = arith.constant 0 : index
    %c0_4 = arith.constant 0 : index
    %8 = vector.load %arg2[%c0_3, %c0_4] : memref<32x128xf32, #tpu.memory_space<vmem>>, vector<32x128xf32>
    %9 = vector.extract_strided_slice %8 {offsets = [0, 0], sizes = [32, 96], strides = [1, 1]} : vector<32x128xf32> to vector<32x96xf32>
    %10 = vector.extract_strided_slice %8 {offsets = [0, 96], sizes = [32, 32], strides = [1, 1]} : vector<32x128xf32> to vector<32x32xf32>
    %cst = arith.constant dense<0.000000e+00> : vector<16xf32>
    %11 = vector.multi_reduction <add>, %0, %cst [1] : vector<16x32xf32> to vector<16xf32>
    %12 = vector.shape_cast %11 : vector<16xf32> to vector<16x1xf32>
    %cst_5 = arith.constant 3.200000e+01 : f32
    %13 = vector.broadcast %cst_5 : f32 to vector<16x1xf32>
    %14 = arith.divf %12, %13 : vector<16x1xf32>
    %15 = vector.broadcast %14 : vector<16x1xf32> to vector<16x32xf32>
    %16 = arith.subf %0, %15 : vector<16x32xf32>
    %17 = arith.mulf %16, %16 : vector<16x32xf32>
    %cst_6 = arith.constant dense<0.000000e+00> : vector<16xf32>
    %18 = vector.multi_reduction <add>, %17, %cst_6 [1] : vector<16x32xf32> to vector<16xf32>
    %19 = vector.shape_cast %18 : vector<16xf32> to vector<16x1xf32>
    %cst_7 = arith.constant 0.0322580636 : f32
    %20 = vector.broadcast %cst_7 : f32 to vector<16x1xf32>
    %21 = arith.mulf %19, %20 : vector<16x1xf32>
    %22 = math.sqrt %21 : vector<16x1xf32>
    %cst_8 = arith.constant 9.99999997E-7 : f32
    %23 = vector.broadcast %cst_8 : f32 to vector<16x1xf32>
    %24 = arith.addf %22, %23 : vector<16x1xf32>
    %25 = tpu.reciprocal %24 : vector<16x1xf32> -> vector<16x1xf32>
    %26 = vector.broadcast %2 : vector<1x32xf32> to vector<16x32xf32>
    %27 = arith.mulf %26, %16 : vector<16x32xf32>
    %28 = vector.broadcast %25 : vector<16x1xf32> to vector<16x32xf32>
    %29 = arith.mulf %27, %28 : vector<16x32xf32>
    %30 = vector.broadcast %3 : vector<1x32xf32> to vector<16x32xf32>
    %31 = arith.addf %29, %30 : vector<16x32xf32>
    %cst_9 = arith.constant dense<0.000000e+00> : vector<16x96xf32>
    %32 = tpu.matmul %31, %9, %cst_9 {dimension_numbers = #tpu.dot_dimension_numbers<[1], [0], [0], [1], [0, 0, 1, 1], [], []>} : vector<16x32xf32>, vector<32x96xf32>, vector<16x96xf32> -> vector<16x96xf32>
    %33 = vector.extract_strided_slice %32 {offsets = [0, 0], sizes = [16, 32], strides = [1, 1]} : vector<16x96xf32> to vector<16x32xf32>
    %34 = vector.shape_cast %33 : vector<16x32xf32> to vector<2x8x32xf32>
    %35 = vector.extract_strided_slice %32 {offsets = [0, 32], sizes = [16, 32], strides = [1, 1]} : vector<16x96xf32> to vector<16x32xf32>
    %36 = vector.shape_cast %35 : vector<16x32xf32> to vector<2x8x32xf32>
    %37 = vector.extract_strided_slice %32 {offsets = [0, 64], sizes = [16, 32], strides = [1, 1]} : vector<16x96xf32> to vector<16x32xf32>
    %38 = vector.shape_cast %37 : vector<16x32xf32> to vector<2x8x32xf32>
    %c0_10 = arith.constant 0 : index
    %c0_11 = arith.constant 0 : index
    %39 = vector.load %arg1[%c0_10, %c0_11] : memref<2x8xf32, #tpu.memory_space<vmem>>, vector<2x8xf32>
    %40 = vector.shape_cast %39 : vector<2x8xf32> to vector<2x1x8xf32>
    %41 = vector.shape_cast %40 : vector<2x1x8xf32> to vector<2x1x8xf32>
    %42 = vector.broadcast %41 : vector<2x1x8xf32> to vector<2x8x8xf32>
    %43 = vector.extract_strided_slice %34 {offsets = [0, 0, 0], sizes = [2, 8, 8], strides = [1, 1, 1]} : vector<2x8x32xf32> to vector<2x8x8xf32>
    %44 = vector.extract_strided_slice %36 {offsets = [0, 0, 0], sizes = [2, 8, 8], strides = [1, 1, 1]} : vector<2x8x32xf32> to vector<2x8x8xf32>
    %45 = vector.extract_strided_slice %38 {offsets = [0, 0, 0], sizes = [2, 8, 8], strides = [1, 1, 1]} : vector<2x8x32xf32> to vector<2x8x8xf32>
    "tpu.trace_start"() <{level = 10 : i32, message = "bqd,bkd->bqk"}> : () -> ()
    %cst_12 = arith.constant dense<0.000000e+00> : vector<2x8x8xf32>
    %46 = tpu.matmul %43, %44, %cst_12 {dimension_numbers = #tpu.dot_dimension_numbers<[2], [2], [1], [1], [0, 0, 0, 1, 1, 1], [0], [0]>} : vector<2x8x8xf32>, vector<2x8x8xf32>, vector<2x8x8xf32> -> vector<2x8x8xf32>
    "tpu.trace_stop"() : () -> ()
    %47 = arith.addf %46, %42 : vector<2x8x8xf32>
    %cst_13 = arith.constant dense<0xFF800000> : vector<2x8xf32>
    %48 = vector.multi_reduction <maximumf>, %47, %cst_13 [2] : vector<2x8x8xf32> to vector<2x8xf32>
    %49 = vector.shape_cast %48 : vector<2x8xf32> to vector<2x8x1xf32>
    %50 = vector.broadcast %49 : vector<2x8x1xf32> to vector<2x8x8xf32>
    %51 = arith.subf %47, %50 : vector<2x8x8xf32>
    %52 = math.exp %51 : vector<2x8x8xf32>
    %cst_14 = arith.constant dense<0.000000e+00> : vector<2x8xf32>
    %53 = vector.multi_reduction <add>, %52, %cst_14 [2] : vector<2x8x8xf32> to vector<2x8xf32>
    %54 = vector.shape_cast %53 : vector<2x8xf32> to vector<2x8x1xf32>
    %55 = tpu.reciprocal %54 {approx = true} : vector<2x8x1xf32> -> vector<2x8x1xf32>
    %56 = vector.broadcast %55 : vector<2x8x1xf32> to vector<2x8x8xf32>
    %57 = arith.mulf %52, %56 : vector<2x8x8xf32>
    "tpu.trace_start"() <{level = 10 : i32, message = "bqk,bkd->bqd"}> : () -> ()
    %cst_15 = arith.constant dense<0.000000e+00> : vector<2x8x8xf32>
    %58 = tpu.matmul %57, %45, %cst_15 {dimension_numbers = #tpu.dot_dimension_numbers<[2], [1], [1], [2], [0, 0, 0, 1, 1, 2], [0], [0]>} : vector<2x8x8xf32>, vector<2x8x8xf32>, vector<2x8x8xf32> -> vector<2x8x8xf32>
    "tpu.trace_stop"() : () -> ()
    %59 = vector.extract_strided_slice %34 {offsets = [0, 0, 8], sizes = [2, 8, 8], strides = [1, 1, 1]} : vector<2x8x32xf32> to vector<2x8x8xf32>
    %60 = vector.extract_strided_slice %36 {offsets = [0, 0, 8], sizes = [2, 8, 8], strides = [1, 1, 1]} : vector<2x8x32xf32> to vector<2x8x8xf32>
    %61 = vector.extract_strided_slice %38 {offsets = [0, 0, 8], sizes = [2, 8, 8], strides = [1, 1, 1]} : vector<2x8x32xf32> to vector<2x8x8xf32>
    "tpu.trace_start"() <{level = 10 : i32, message = "bqd,bkd->bqk"}> : () -> ()
    %cst_16 = arith.constant dense<0.000000e+00> : vector<2x8x8xf32>
    %62 = tpu.matmul %59, %60, %cst_16 {dimension_numbers = #tpu.dot_dimension_numbers<[2], [2], [1], [1], [0, 0, 0, 1, 1, 1], [0], [0]>} : vector<2x8x8xf32>, vector<2x8x8xf32>, vector<2x8x8xf32> -> vector<2x8x8xf32>
    "tpu.trace_stop"() : () -> ()
    %63 = arith.addf %62, %42 : vector<2x8x8xf32>
    %cst_17 = arith.constant dense<0xFF800000> : vector<2x8xf32>
    %64 = vector.multi_reduction <maximumf>, %63, %cst_17 [2] : vector<2x8x8xf32> to vector<2x8xf32>
    %65 = vector.shape_cast %64 : vector<2x8xf32> to vector<2x8x1xf32>
    %66 = vector.broadcast %65 : vector<2x8x1xf32> to vector<2x8x8xf32>
    %67 = arith.subf %63, %66 : vector<2x8x8xf32>
    %68 = math.exp %67 : vector<2x8x8xf32>
    %cst_18 = arith.constant dense<0.000000e+00> : vector<2x8xf32>
    %69 = vector.multi_reduction <add>, %68, %cst_18 [2] : vector<2x8x8xf32> to vector<2x8xf32>
    %70 = vector.shape_cast %69 : vector<2x8xf32> to vector<2x8x1xf32>
    %71 = tpu.reciprocal %70 {approx = true} : vector<2x8x1xf32> -> vector<2x8x1xf32>
    %72 = vector.broadcast %71 : vector<2x8x1xf32> to vector<2x8x8xf32>
    %73 = arith.mulf %68, %72 : vector<2x8x8xf32>
    "tpu.trace_start"() <{level = 10 : i32, message = "bqk,bkd->bqd"}> : () -> ()
    %cst_19 = arith.constant dense<0.000000e+00> : vector<2x8x8xf32>
    %74 = tpu.matmul %73, %61, %cst_19 {dimension_numbers = #tpu.dot_dimension_numbers<[2], [1], [1], [2], [0, 0, 0, 1, 1, 2], [0], [0]>} : vector<2x8x8xf32>, vector<2x8x8xf32>, vector<2x8x8xf32> -> vector<2x8x8xf32>
    "tpu.trace_stop"() : () -> ()
    %75 = vector.extract_strided_slice %34 {offsets = [0, 0, 16], sizes = [2, 8, 8], strides = [1, 1, 1]} : vector<2x8x32xf32> to vector<2x8x8xf32>
    %76 = vector.extract_strided_slice %36 {offsets = [0, 0, 16], sizes = [2, 8, 8], strides = [1, 1, 1]} : vector<2x8x32xf32> to vector<2x8x8xf32>
    %77 = vector.extract_strided_slice %38 {offsets = [0, 0, 16], sizes = [2, 8, 8], strides = [1, 1, 1]} : vector<2x8x32xf32> to vector<2x8x8xf32>
    "tpu.trace_start"() <{level = 10 : i32, message = "bqd,bkd->bqk"}> : () -> ()
    %cst_20 = arith.constant dense<0.000000e+00> : vector<2x8x8xf32>
    %78 = tpu.matmul %75, %76, %cst_20 {dimension_numbers = #tpu.dot_dimension_numbers<[2], [2], [1], [1], [0, 0, 0, 1, 1, 1], [0], [0]>} : vector<2x8x8xf32>, vector<2x8x8xf32>, vector<2x8x8xf32> -> vector<2x8x8xf32>
    "tpu.trace_stop"() : () -> ()
    %79 = arith.addf %78, %42 : vector<2x8x8xf32>
    %cst_21 = arith.constant dense<0xFF800000> : vector<2x8xf32>
    %80 = vector.multi_reduction <maximumf>, %79, %cst_21 [2] : vector<2x8x8xf32> to vector<2x8xf32>
    %81 = vector.shape_cast %80 : vector<2x8xf32> to vector<2x8x1xf32>
    %82 = vector.broadcast %81 : vector<2x8x1xf32> to vector<2x8x8xf32>
    %83 = arith.subf %79, %82 : vector<2x8x8xf32>
    %84 = math.exp %83 : vector<2x8x8xf32>
    %cst_22 = arith.constant dense<0.000000e+00> : vector<2x8xf32>
    %85 = vector.multi_reduction <add>, %84, %cst_22 [2] : vector<2x8x8xf32> to vector<2x8xf32>
    %86 = vector.shape_cast %85 : vector<2x8xf32> to vector<2x8x1xf32>
    %87 = tpu.reciprocal %86 {approx = true} : vector<2x8x1xf32> -> vector<2x8x1xf32>
    %88 = vector.broadcast %87 : vector<2x8x1xf32> to vector<2x8x8xf32>
    %89 = arith.mulf %84, %88 : vector<2x8x8xf32>
    "tpu.trace_start"() <{level = 10 : i32, message = "bqk,bkd->bqd"}> : () -> ()
    %cst_23 = arith.constant dense<0.000000e+00> : vector<2x8x8xf32>
    %90 = tpu.matmul %89, %77, %cst_23 {dimension_numbers = #tpu.dot_dimension_numbers<[2], [1], [1], [2], [0, 0, 0, 1, 1, 2], [0], [0]>} : vector<2x8x8xf32>, vector<2x8x8xf32>, vector<2x8x8xf32> -> vector<2x8x8xf32>
    "tpu.trace_stop"() : () -> ()
    %91 = vector.extract_strided_slice %34 {offsets = [0, 0, 24], sizes = [2, 8, 8], strides = [1, 1, 1]} : vector<2x8x32xf32> to vector<2x8x8xf32>
    %92 = vector.extract_strided_slice %36 {offsets = [0, 0, 24], sizes = [2, 8, 8], strides = [1, 1, 1]} : vector<2x8x32xf32> to vector<2x8x8xf32>
    %93 = vector.extract_strided_slice %38 {offsets = [0, 0, 24], sizes = [2, 8, 8], strides = [1, 1, 1]} : vector<2x8x32xf32> to vector<2x8x8xf32>
    "tpu.trace_start"() <{level = 10 : i32, message = "bqd,bkd->bqk"}> : () -> ()
    %cst_24 = arith.constant dense<0.000000e+00> : vector<2x8x8xf32>
    %94 = tpu.matmul %91, %92, %cst_24 {dimension_numbers = #tpu.dot_dimension_numbers<[2], [2], [1], [1], [0, 0, 0, 1, 1, 1], [0], [0]>} : vector<2x8x8xf32>, vector<2x8x8xf32>, vector<2x8x8xf32> -> vector<2x8x8xf32>
    "tpu.trace_stop"() : () -> ()
    %95 = arith.addf %94, %42 : vector<2x8x8xf32>
    %cst_25 = arith.constant dense<0xFF800000> : vector<2x8xf32>
    %96 = vector.multi_reduction <maximumf>, %95, %cst_25 [2] : vector<2x8x8xf32> to vector<2x8xf32>
    %97 = vector.shape_cast %96 : vector<2x8xf32> to vector<2x8x1xf32>
    %98 = vector.broadcast %97 : vector<2x8x1xf32> to vector<2x8x8xf32>
    %99 = arith.subf %95, %98 : vector<2x8x8xf32>
    %100 = math.exp %99 : vector<2x8x8xf32>
    %cst_26 = arith.constant dense<0.000000e+00> : vector<2x8xf32>
    %101 = vector.multi_reduction <add>, %100, %cst_26 [2] : vector<2x8x8xf32> to vector<2x8xf32>
    %102 = vector.shape_cast %101 : vector<2x8xf32> to vector<2x8x1xf32>
    %103 = tpu.reciprocal %102 {approx = true} : vector<2x8x1xf32> -> vector<2x8x1xf32>
    %104 = vector.broadcast %103 : vector<2x8x1xf32> to vector<2x8x8xf32>
    %105 = arith.mulf %100, %104 : vector<2x8x8xf32>
    "tpu.trace_start"() <{level = 10 : i32, message = "bqk,bkd->bqd"}> : () -> ()
    %cst_27 = arith.constant dense<0.000000e+00> : vector<2x8x8xf32>
    %106 = tpu.matmul %105, %93, %cst_27 {dimension_numbers = #tpu.dot_dimension_numbers<[2], [1], [1], [2], [0, 0, 0, 1, 1, 2], [0], [0]>} : vector<2x8x8xf32>, vector<2x8x8xf32>, vector<2x8x8xf32> -> vector<2x8x8xf32>
    "tpu.trace_stop"() : () -> ()
    %107 = tpu.concatenate %58, %74, %90, %106 in 2 : vector<2x8x8xf32>, vector<2x8x8xf32>, vector<2x8x8xf32>, vector<2x8x8xf32> -> vector<2x8x32xf32>
    %108 = vector.shape_cast %107 : vector<2x8x32xf32> to vector<16x32xf32>
    %cst_28 = arith.constant dense<0.000000e+00> : vector<16x32xf32>
    %109 = tpu.matmul %108, %10, %cst_28 {dimension_numbers = #tpu.dot_dimension_numbers<[1], [0], [0], [1], [0, 0, 1, 1], [], []>} : vector<16x32xf32>, vector<32x32xf32>, vector<16x32xf32> -> vector<16x32xf32>
    %110 = arith.addf %0, %109 : vector<16x32xf32>
    %cst_29 = arith.constant dense<0.000000e+00> : vector<16xf32>
    %111 = vector.multi_reduction <add>, %110, %cst_29 [1] : vector<16x32xf32> to vector<16xf32>
    %112 = vector.shape_cast %111 : vector<16xf32> to vector<16x1xf32>
    %cst_30 = arith.constant 3.200000e+01 : f32
    %113 = vector.broadcast %cst_30 : f32 to vector<16x1xf32>
    %114 = arith.divf %112, %113 : vector<16x1xf32>
    %115 = vector.broadcast %114 : vector<16x1xf32> to vector<16x32xf32>
    %116 = arith.subf %110, %115 : vector<16x32xf32>
    %117 = arith.mulf %116, %116 : vector<16x32xf32>
    %cst_31 = arith.constant dense<0.000000e+00> : vector<16xf32>
    %118 = vector.multi_reduction <add>, %117, %cst_31 [1] : vector<16x32xf32> to vector<16xf32>
    %119 = vector.shape_cast %118 : vector<16xf32> to vector<16x1xf32>
    %cst_32 = arith.constant 0.0322580636 : f32
    %120 = vector.broadcast %cst_32 : f32 to vector<16x1xf32>
    %121 = arith.mulf %119, %120 : vector<16x1xf32>
    %122 = math.sqrt %121 : vector<16x1xf32>
    %cst_33 = arith.constant 9.99999997E-7 : f32
    %123 = vector.broadcast %cst_33 : f32 to vector<16x1xf32>
    %124 = arith.addf %122, %123 : vector<16x1xf32>
    %125 = tpu.reciprocal %124 : vector<16x1xf32> -> vector<16x1xf32>
    %126 = vector.broadcast %4 : vector<1x32xf32> to vector<16x32xf32>
    %127 = arith.mulf %126, %116 : vector<16x32xf32>
    %128 = vector.broadcast %125 : vector<16x1xf32> to vector<16x32xf32>
    %129 = arith.mulf %127, %128 : vector<16x32xf32>
    %130 = vector.broadcast %5 : vector<1x32xf32> to vector<16x32xf32>
    %131 = arith.addf %129, %130 : vector<16x32xf32>
    %c0_34 = arith.constant 0 : index
    %c0_35 = arith.constant 0 : index
    %132 = vector.load %arg3[%c0_34, %c0_35] : memref<32x64xf32, #tpu.memory_space<vmem>>, vector<32x64xf32>
    %cst_36 = arith.constant dense<0.000000e+00> : vector<16x64xf32>
    %133 = tpu.matmul %131, %132, %cst_36 {dimension_numbers = #tpu.dot_dimension_numbers<[1], [0], [0], [1], [0, 0, 1, 1], [], []>} : vector<16x32xf32>, vector<32x64xf32>, vector<16x64xf32> -> vector<16x64xf32>
    %134 = vector.broadcast %6 : vector<1x64xf32> to vector<16x64xf32>
    %135 = arith.addf %133, %134 : vector<16x64xf32>
    %cst_37 = arith.constant 0.000000e+00 : f32
    %136 = vector.broadcast %cst_37 : f32 to vector<16x64xf32>
    %137 = arith.maximumf %135, %136 : vector<16x64xf32>
    %c0_38 = arith.constant 0 : index
    %c0_39 = arith.constant 0 : index
    %138 = vector.load %arg4[%c0_38, %c0_39] : memref<64x32xf32, #tpu.memory_space<vmem>>, vector<64x32xf32>
    %cst_40 = arith.constant dense<0.000000e+00> : vector<16x32xf32>
    %139 = tpu.matmul %137, %138, %cst_40 {dimension_numbers = #tpu.dot_dimension_numbers<[1], [0], [0], [1], [0, 0, 1, 1], [], []>} : vector<16x64xf32>, vector<64x32xf32>, vector<16x32xf32> -> vector<16x32xf32>
    %140 = vector.broadcast %7 : vector<1x32xf32> to vector<16x32xf32>
    %141 = arith.addf %139, %140 : vector<16x32xf32>
    %142 = arith.addf %110, %141 : vector<16x32xf32>
    %c0_41 = arith.constant 0 : index
    %c0_42 = arith.constant 0 : index
    %143 = vector.load %arg6[%c0_41, %c0_42] : memref<16x32xf32, #tpu.memory_space<vmem>>, vector<16x32xf32>
    tpu.vector_store %arg6[%c0_41, %c0_42], %142 {strides = array<i32>} : memref<16x32xf32, #tpu.memory_space<vmem>>, vector<16x32xf32>,
    return
  }
}

</mosaic_0001>

<llo_original>
// kernel: encoder_block.1
$region0: #{encoder_block.1}
  #allocation0 [shape = 'u32[]', space=smem, size = 0x4, offset = 0x4, fixed_abs, tag = 'smem constant byte address 0x4 - core index']
  #allocation1 [shape = 'u32[144,128]{1,0:T(1,128)}', space=vmem, size = 0x12000, scoped, tag = 'internal scratch']
  %s0 = inlined_call_operand.vmem [shape: f32[16,32], index: 0, kind: input, shape index: {}]
  %s1 = inlined_call_operand.vmem [shape: f32[2,8], index: 1, kind: input, shape index: {}]
  %s2 = inlined_call_operand.vmem [shape: f32[32,128], index: 2, kind: input, shape index: {}]
  %s3 = inlined_call_operand.vmem [shape: f32[32,64], index: 3, kind: input, shape index: {}]
  %s4 = inlined_call_operand.vmem [shape: f32[64,32], index: 4, kind: input, shape index: {}]
  %s5 = inlined_call_operand.vmem [shape: f32[2,128], index: 5, kind: input, shape index: {}]
  %s6 = inlined_call_operand.hbm [shape: f32[16,32], index: 6, kind: output, shape index: {}]
  %s7 = sld [smem:[#allocation0]]
  $region34: #{encoder_block.1} parent=0
    _
  %s9 = ssub.s32 1, %s7
  %s10 = scalar_select 0, %s9, %s7
  $region1: #{encoder_block.1} parent=0
    #allocation2 [shape = 'u8[8192]{0}', space=vmem, size = 0x2000, scoped, tag = 'output window, operand 0, single buffered']
    #allocation3 [shape = 's32[1]{0}', space=sflag, size = 0x4, scoped, tag = 'scoped memory for encoder_block.1']
    %11 = vsyncpa [#allocation3], 0
    // Predicated region
    $region2: #{encoder_block.1} parent=1 // pred_check
      _
    $region3: #{encoder_block.1} parent=1 // pred_check_branch
      %13 = sbr.rel (0) target = $region5
    $region4: #{encoder_block.1} parent=1 // pred_region
      _
    $region5: #{encoder_block.1} parent=1 // pred_fallthru
      _
    // Predicated region
    $region6: #{encoder_block.1} parent=1 // pred_check
      _
    $region7: #{encoder_block.1} parent=1 // pred_check_branch
      %15 = sbr.rel (0) target = $region9
    $region8: #{encoder_block.1} parent=1 // pred_region
      _
    $region9: #{encoder_block.1} parent=1 // pred_fallthru
      _
    // Predicated region
    $region10: #{encoder_block.1} parent=1 // pred_check
      _
    $region11: #{encoder_block.1} parent=1 // pred_check_branch
      %17 = sbr.rel (0) target = $region13
    $region12: #{encoder_block.1} parent=1 // pred_region
      _
    $region13: #{encoder_block.1} parent=1 // pred_fallthru
      _
    // Predicated region
    $region14: #{encoder_block.1} parent=1 // pred_check
      _
    $region15: #{encoder_block.1} parent=1 // pred_check_branch
      %19 = sbr.rel (0) target = $region17
    $region16: #{encoder_block.1} parent=1 // pred_region
      _
    $region17: #{encoder_block.1} parent=1 // pred_fallthru
      _
    // Predicated region
    $region18: #{encoder_block.1} parent=1 // pred_check
      _
    $region19: #{encoder_block.1} parent=1 // pred_check_branch
      %21 = sbr.rel (0) target = $region21
    $region20: #{encoder_block.1} parent=1 // pred_region
      _
    $region21: #{encoder_block.1} parent=1 // pred_fallthru
      _
    // Predicated region
    $region22: #{encoder_block.1} parent=1 // pred_check
      _
    $region23: #{encoder_block.1} parent=1 // pred_check_branch
      %23 = sbr.rel (0) target = $region25
    $region24: #{encoder_block.1} parent=1 // pred_region
      _
    $region25: #{encoder_block.1} parent=1 // pred_fallthru
      _
    %v24 = vld [vmem:[%s0] sm:$0xff]
    %v25 = vld [vmem:[%s0 + $0x8] sm:$0xff]
    %v26 = vld [vmem:[%s5] sm:$0x3]
    %v27 = vld [vmem:[%s2] sm:$0xff]
    %v28 = vld [vmem:[%s2 + $0x8] sm:$0xff]
    %v29 = vld [vmem:[%s2 + $0x10] sm:$0xff]
    %v30 = vld [vmem:[%s2 + $0x18] sm:$0xff]
    %vm31 = vcmask 261120
    %v32 = vsel %vm31, %v24, 0.0
    %33 = vadd.xlane.f32.xlu0 %v32
    %v34 = vpop.xlane.xlu0 %33
    %v35 = vsel %vm31, %v25, 0.0
    %36 = vadd.xlane.f32.xlu0 %v35
    %v37 = vpop.xlane.xlu0 %36
    %v38 = vrcp.pop 32.0
    %v39 = vmul.f32 %v34, %v38
    %v40 = vmul.f32 %v37, %v38
    %v41 = vsub.f32 %v24, %v39
    %v42 = vsub.f32 %v25, %v40
    %v43 = vmul.f32 %v41, %v41
    %v44 = vmul.f32 %v42, %v42
    %v45 = vsel %vm31, %v43, 0.0
    %46 = vadd.xlane.f32.xlu0 %v45
    %v47 = vpop.xlane.xlu0 %46
    %v48 = vsel %vm31, %v44, 0.0
    %49 = vadd.xlane.f32.xlu0 %v48
    %v50 = vpop.xlane.xlu0 %49
    %v51 = vmul.f32 %v47, 0.032258064
    %v52 = vmul.f32 %v50, 0.032258064
    %v53 = vrsqrt.pop %v51
    %v54 = vmul.f32 %v51, %v53
    %vm55 = vcmp.eq.f32.partialorder %v51, inf
    %v56 = vsel %vm55, %v51, %v54
    %vm57 = vcmp.eq.f32.partialorder %v51, 0.0
    %v58 = vand.u32 %v51, 2147483648
    %v59 = vsel %vm57, %v58, %v56
    %v60 = vrsqrt.pop %v52
    %v61 = vmul.f32 %v52, %v60
    %vm62 = vcmp.eq.f32.partialorder %v52, inf
    %v63 = vsel %vm62, %v52, %v61
    %vm64 = vcmp.eq.f32.partialorder %v52, 0.0
    %v65 = vand.u32 %v52, 2147483648
    %v66 = vsel %vm64, %v65, %v63
    %v67 = vadd.f32 %v59, 1e-06
    %v68 = vadd.f32 %v66, 1e-06
    %v69 = vrcp.pop %v67
    %v70 = vrcp.pop %v68
    %v71 = vlaneseq
    %v72 = vshrl.u32 %v71, 7
    %v73 = vsub.s32 0, %v72
    %v74 = vrot.slane %v26, %v73
    %v75 = vmul.f32 %v74, %v41
    %v76 = vmul.f32 %v74, %v42
    %v77 = vmul.f32 %v75, %v69
    %v78 = vmul.f32 %v76, %v70
    %80 = vrot.lane.b32.xlu0 %v74, 96
    %v81 = vpop.permute.xlu0 %80
    %v83 = vadd.f32 %v77, %v81
    %v84 = vadd.f32 %v78, %v81
    %v86 = vsel %vm31, %v83, 0
    %v89 = vsel %vm31, %v84, 0
    %91 = vmatprep.subr.mxu0 0.0
    %92 = vmatpush1.msra.mxu0 %v27
    %93 = vmatprep.subr.mxu0 0.0
    %94 = vmatpush1.msra.mxu0 %v28
    %95 = vmatprep.subr.mxu0 0.0
    %96 = vmatpush1.msra.mxu0 %v29
    %97 = vmatprep.subr.mxu0 0.0
    %98 = vmatpush1.msra.mxu0 %v30
    %99 = vmatprep.subr.mxu0 0.0
    %100 = vmatpush1.msra.mxu0 0.0
    %101 = vmatprep.subr.mxu0 0.0
    %102 = vmatpush1.msra.mxu0 0.0
    %103 = vmatprep.subr.mxu0 0.0
    %104 = vmatpush1.msra.mxu0 0.0
    %105 = vmatprep.subr.mxu0 0.0
    %106 = vmatpush1.msra.mxu0 0.0
    %107 = vmatprep.subr.mxu0 0.0
    %108 = vmatpush1.msra.mxu0 0.0
    %109 = vmatprep.subr.mxu0 0.0
    %110 = vmatpush1.msra.mxu0 0.0
    %111 = vmatprep.subr.mxu0 0.0
    %112 = vmatpush1.msra.mxu0 0.0
    %113 = vmatprep.subr.mxu0 0.0
    %114 = vmatpush1.msra.mxu0 0.0
    %115 = vmatprep.subr.mxu0 0.0
    %116 = vmatpush1.msra.mxu0 0.0
    %117 = vmatprep.subr.mxu0 0.0
    %118 = vmatpush1.msra.mxu0 0.0
    %119 = vmatprep.subr.mxu0 0.0
    %120 = vmatpush1.msra.mxu0 0.0
    %121 = vmatprep.subr.mxu0 0.0
    %122 = vmatpush1.msra.mxu0 0.0
    %123 = vmatprep.subr.mxu0 0.0
    %124 = vmatpush1.msra.mxu0 0.0
    %125 = vmatprep.subr.mxu0 0.0
    %126 = vmatpush1.msra.mxu0 0.0
    %127 = vmatprep.subr.mxu0 0.0
    %128 = vmatpush1.msra.mxu0 0.0
    %129 = vmatprep.subr.mxu0 0.0
    %130 = vmatpush1.msra.mxu0 0.0
    %131 = vmatprep.subr.mxu0 0.0
    %132 = vmatpush1.msra.mxu0 0.0
    %133 = vmatprep.subr.mxu0 0.0
    %134 = vmatpush1.msra.mxu0 0.0
    %135 = vmatprep.subr.mxu0 0.0
    %136 = vmatpush1.msra.mxu0 0.0
    %137 = vmatprep.subr.mxu0 0.0
    %138 = vmatpush1.msra.mxu0 0.0
    %139 = vmatprep.subr.mxu0 0.0
    %140 = vmatpush1.msra.mxu0 0.0
    %141 = vmatprep.subr.mxu0 0.0
    %142 = vmatpush1.msra.mxu0 0.0
    %143 = vmatprep.subr.mxu0 0.0
    %144 = vmatpush1.msra.mxu0 0.0
    %145 = vmatprep.subr.mxu0 0.0
    %146 = vmatpush1.msra.mxu0 0.0
    %147 = vmatprep.subr.mxu0 0.0
    %148 = vmatpush1.msra.mxu0 0.0
    %149 = vmatprep.subr.mxu0 0.0
    %150 = vmatpush1.msra.mxu0 0.0
    %151 = vmatprep.subr.mxu0 0.0
    %152 = vmatpush1.msra.mxu0 0.0
    %153 = vmatprep.subr.mxu0 0.0
    %154 = vmatpush1.msra.mxu0 0.0
    %155 = vmatprep.mubr.f32.mxu0 0.0
    %156 = vmatmul.mubr.f32.gmra.mrb[0].mxu0 %v86
    %v157 = vpop.f32.mrb[0].mxu0
    %v158 = vadd.f32 0.0, %v157
    %v159 = vpop.f32.mrb[0].mxu0
    %160 = vmatprep.mubr.f32.mxu0 0.0
    %161 = vmatmul.mubr.f32.gmra.mrb[0].mxu0 %v89
    %v162 = vpop.f32.mrb[0].mxu0
    %v163 = vadd.f32 0.0, %v162
    %v164 = vpop.f32.mrb[0].mxu0
    %165 = vdwg.mxu0
    %v166 = vld [vmem:[%s1] sm:$0x3]
    %v169 = vunpack.c.l.s4 1966171168
    %v170 = vunpack.c.0.s8 %v169
    %v171 = vlaneseq
    %v172 = vshrl.u32 %v171, 7
    %v173 = vsub.s32 %v170, %v172
    %v174 = vrot.slane %v166, %v173
    %v175 = vcombine.high %v174, %v174
    %v177 = vunpack.c.l.s4 1966171168
    %v178 = vunpack.c.0.s8 %v177
    %v179 = vlaneseq
    %v180 = vshrl.u32 %v179, 7
    %v181 = vsub.s32 %v178, %v180
    %v182 = vrot.slane %v174, %v181
    %v184 = vunpack.c.l.s4 1966171168
    %v185 = vunpack.c.0.s8 %v184
    %v186 = vlaneseq
    %v187 = vshrl.u32 %v186, 7
    %v188 = vsub.s32 %v185, %v187
    %v189 = vrot.slane %v175, %v188
    %v190 = vlaneseq
    %v191 = vshrl.u32 %v190, 7
    %v192 = vsub.s32 0, %v191
    %v193 = vrot.slane %v182, %v192
    %v194 = vlaneseq
    %v195 = vshrl.u32 %v194, 7
    %v196 = vsub.s32 0, %v195
    %v197 = vrot.slane %v189, %v196
    %201 = vrot.lane.b32.xlu0 %v158, 96
    %v202 = vpop.permute.xlu0 %201
    %vm203 = vcmask 64512
    %v204 = vsel %vm203, %v158, 0
    %v206 = vsel %vm203, %v202, 0
    %208 = vmatprep.subr.mxu0 0.0
    %209 = vmatpush1.xpose.msra.mxu0 %v206
    %210 = vmatprep.subr.mxu0 0.0
    %211 = vmatpush1.xpose.msra.mxu0 0.0
    %212 = vmatprep.subr.mxu0 0.0
    %213 = vmatpush1.xpose.msra.mxu0 0.0
    %214 = vmatprep.subr.mxu0 0.0
    %215 = vmatpush1.xpose.msra.mxu0 0.0
    %216 = vmatprep.subr.mxu0 0.0
    %217 = vmatpush1.xpose.msra.mxu0 0.0
    %218 = vmatprep.subr.mxu0 0.0
    %219 = vmatpush1.xpose.msra.mxu0 0.0
    %220 = vmatprep.subr.mxu0 0.0
    %221 = vmatpush1.xpose.msra.mxu0 0.0
    %222 = vmatprep.subr.mxu0 0.0
    %223 = vmatpush1.xpose.msra.mxu0 0.0
    %224 = vmatprep.subr.mxu0 0.0
    %225 = vmatpush1.xpose.msra.mxu0 0.0
    %226 = vmatprep.subr.mxu0 0.0
    %227 = vmatpush1.xpose.msra.mxu0 0.0
    %228 = vmatprep.subr.mxu0 0.0
    %229 = vmatpush1.xpose.msra.mxu0 0.0
    %230 = vmatprep.subr.mxu0 0.0
    %231 = vmatpush1.xpose.msra.mxu0 0.0
    %232 = vmatprep.subr.mxu0 0.0
    %233 = vmatpush1.xpose.msra.mxu0 0.0
    %234 = vmatprep.subr.mxu0 0.0
    %235 = vmatpush1.xpose.msra.mxu0 0.0
    %236 = vmatprep.subr.mxu0 0.0
    %237 = vmatpush1.xpose.msra.mxu0 0.0
    %238 = vmatprep.subr.mxu0 0.0
    %239 = vmatpush1.xpose.msra.mxu0 0.0
    %240 = vmatprep.subr.mxu0 0.0
    %241 = vmatpush1.xpose.msra.mxu0 0.0
    %242 = vmatprep.subr.mxu0 0.0
    %243 = vmatpush1.xpose.msra.mxu0 0.0
    %244 = vmatprep.subr.mxu0 0.0
    %245 = vmatpush1.xpose.msra.mxu0 0.0
    %246 = vmatprep.subr.mxu0 0.0
    %247 = vmatpush1.xpose.msra.mxu0 0.0
    %248 = vmatprep.subr.mxu0 0.0
    %249 = vmatpush1.xpose.msra.mxu0 0.0
    %250 = vmatprep.subr.mxu0 0.0
    %251 = vmatpush1.xpose.msra.mxu0 0.0
    %252 = vmatprep.subr.mxu0 0.0
    %253 = vmatpush1.xpose.msra.mxu0 0.0
    %254 = vmatprep.subr.mxu0 0.0
    %255 = vmatpush1.xpose.msra.mxu0 0.0
    %256 = vmatprep.subr.mxu0 0.0
    %257 = vmatpush1.xpose.msra.mxu0 0.0
    %258 = vmatprep.subr.mxu0 0.0
    %259 = vmatpush1.xpose.msra.mxu0 0.0
    %260 = vmatprep.subr.mxu0 0.0
    %261 = vmatpush1.xpose.msra.mxu0 0.0
    %262 = vmatprep.subr.mxu0 0.0
    %263 = vmatpush1.xpose.msra.mxu0 0.0
    %264 = vmatprep.subr.mxu0 0.0
    %265 = vmatpush1.xpose.msra.mxu0 0.0
    %266 = vmatprep.subr.mxu0 0.0
    %267 = vmatpush1.xpose.msra.mxu0 0.0
    %268 = vmatprep.subr.mxu0 0.0
    %269 = vmatpush1.xpose.msra.mxu0 0.0
    %270 = vmatprep.subr.mxu0 0.0
    %271 = vmatpush1.xpose.msra.mxu0 0.0
    %272 = vmatprep.mubr.f32.mxu0 0.0
    %273 = vmatmul.mubr.f32.gmra.mrb[0].mxu0 %v204
    %v274 = vpop.f32.mrb[0].mxu0
    %v275 = vadd.f32 %v193, %v274
    %v276 = vpop.f32.mrb[0].mxu0
    %277 = vdwg.mxu0
    %279 = vrot.lane.b32.xlu0 %v163, 96
    %v280 = vpop.permute.xlu0 %279
    %v281 = vsel %vm203, %v163, 0
    %v283 = vsel %vm203, %v280, 0
    %285 = vmatprep.subr.mxu0 0.0
    %286 = vmatpush1.xpose.msra.mxu0 %v283
    %287 = vmatprep.subr.mxu0 0.0
    %288 = vmatpush1.xpose.msra.mxu0 0.0
    %289 = vmatprep.subr.mxu0 0.0
    %290 = vmatpush1.xpose.msra.mxu0 0.0
    %291 = vmatprep.subr.mxu0 0.0
    %292 = vmatpush1.xpose.msra.mxu0 0.0
    %293 = vmatprep.subr.mxu0 0.0
    %294 = vmatpush1.xpose.msra.mxu0 0.0
    %295 = vmatprep.subr.mxu0 0.0
    %296 = vmatpush1.xpose.msra.mxu0 0.0
    %297 = vmatprep.subr.mxu0 0.0
    %298 = vmatpush1.xpose.msra.mxu0 0.0
    %299 = vmatprep.subr.mxu0 0.0
    %300 = vmatpush1.xpose.msra.mxu0 0.0
    %301 = vmatprep.subr.mxu0 0.0
    %302 = vmatpush1.xpose.msra.mxu0 0.0
    %303 = vmatprep.subr.mxu0 0.0
    %304 = vmatpush1.xpose.msra.mxu0 0.0
    %305 = vmatprep.subr.mxu0 0.0
    %306 = vmatpush1.xpose.msra.mxu0 0.0
    %307 = vmatprep.subr.mxu0 0.0
    %308 = vmatpush1.xpose.msra.mxu0 0.0
    %309 = vmatprep.subr.mxu0 0.0
    %310 = vmatpush1.xpose.msra.mxu0 0.0
    %311 = vmatprep.subr.mxu0 0.0
    %312 = vmatpush1.xpose.msra.mxu0 0.0
    %313 = vmatprep.subr.mxu0 0.0
    %314 = vmatpush1.xpose.msra.mxu0 0.0
    %315 = vmatprep.subr.mxu0 0.0
    %316 = vmatpush1.xpose.msra.mxu0 0.0
    %317 = vmatprep.subr.mxu0 0.0
    %318 = vmatpush1.xpose.msra.mxu0 0.0
    %319 = vmatprep.subr.mxu0 0.0
    %320 = vmatpush1.xpose.msra.mxu0 0.0
    %321 = vmatprep.subr.mxu0 0.0
    %322 = vmatpush1.xpose.msra.mxu0 0.0
    %323 = vmatprep.subr.mxu0 0.0
    %324 = vmatpush1.xpose.msra.mxu0 0.0
    %325 = vmatprep.subr.mxu0 0.0
    %326 = vmatpush1.xpose.msra.mxu0 0.0
    %327 = vmatprep.subr.mxu0 0.0
    %328 = vmatpush1.xpose.msra.mxu0 0.0
    %329 = vmatprep.subr.mxu0 0.0
    %330 = vmatpush1.xpose.msra.mxu0 0.0
    %331 = vmatprep.subr.mxu0 0.0
    %332 = vmatpush1.xpose.msra.mxu0 0.0
    %333 = vmatprep.subr.mxu0 0.0
    %334 = vmatpush1.xpose.msra.mxu0 0.0
    %335 = vmatprep.subr.mxu0 0.0
    %336 = vmatpush1.xpose.msra.mxu0 0.0
    %337 = vmatprep.subr.mxu0 0.0
    %338 = vmatpush1.xpose.msra.mxu0 0.0
    %339 = vmatprep.subr.mxu0 0.0
    %340 = vmatpush1.xpose.msra.mxu0 0.0
    %341 = vmatprep.subr.mxu0 0.0
    %342 = vmatpush1.xpose.msra.mxu0 0.0
    %343 = vmatprep.subr.mxu0 0.0
    %344 = vmatpush1.xpose.msra.mxu0 0.0
    %345 = vmatprep.subr.mxu0 0.0
    %346 = vmatpush1.xpose.msra.mxu0 0.0
    %347 = vmatprep.subr.mxu0 0.0
    %348 = vmatpush1.xpose.msra.mxu0 0.0
    %349 = vmatprep.mubr.f32.mxu0 0.0
    %350 = vmatmul.mubr.f32.gmra.mrb[0].mxu0 %v281
    %v351 = vpop.f32.mrb[0].mxu0
    %v352 = vadd.f32 %v197, %v351
    %v353 = vpop.f32.mrb[0].mxu0
    %354 = vdwg.mxu0
    %v355 = vsel %vm203, %v275, -inf
    %356 = vmax.xlane.f32.xlu0 %v355
    %v357 = vpop.xlane.xlu0 %356
    %v358 = vsel %vm203, %v352, -inf
    %359 = vmax.xlane.f32.xlu0 %v358
    %v360 = vpop.xlane.xlu0 %359
    %v361 = vsub.f32 %v275, %v357
    %v362 = vsub.f32 %v352, %v360
    %v363 = vmul.f32 %v361, 1.442695
    %v364 = vpow.pop %v363
    %v365 = vmul.f32 %v362, 1.442695
    %v366 = vpow.pop %v365
    %v367 = vsel %vm203, %v364, 0.0
    %368 = vadd.xlane.f32.xlu0 %v367
    %v369 = vpop.xlane.xlu0 %368
    %v370 = vsel %vm203, %v366, 0.0
    %371 = vadd.xlane.f32.xlu0 %v370
    %v372 = vpop.xlane.xlu0 %371
    %v373 = vrcp.pop %v369
    %v374 = vrcp.pop %v372
    %v375 = vmul.f32 %v364, %v373
    %v376 = vmul.f32 %v366, %v374
    %377 = vrot.lane.b32.xlu0 %v158, 64
    %v378 = vpop.permute.xlu0 %377
    %v381 = vsel %vm203, %v375, 0
    %383 = vmatprep.subr.mxu0 0.0
    %384 = vmatpush1.msra.mxu0 %v378
    %385 = vmatprep.subr.mxu0 0.0
    %386 = vmatpush1.msra.mxu0 0.0
    %387 = vmatprep.subr.mxu0 0.0
    %388 = vmatpush1.msra.mxu0 0.0
    %389 = vmatprep.subr.mxu0 0.0
    %390 = vmatpush1.msra.mxu0 0.0
    %391 = vmatprep.subr.mxu0 0.0
    %392 = vmatpush1.msra.mxu0 0.0
    %393 = vmatprep.subr.mxu0 0.0
    %394 = vmatpush1.msra.mxu0 0.0
    %395 = vmatprep.subr.mxu0 0.0
    %396 = vmatpush1.msra.mxu0 0.0
    %397 = vmatprep.subr.mxu0 0.0
    %398 = vmatpush1.msra.mxu0 0.0
    %399 = vmatprep.subr.mxu0 0.0
    %400 = vmatpush1.msra.mxu0 0.0
    %401 = vmatprep.subr.mxu0 0.0
    %402 = vmatpush1.msra.mxu0 0.0
    %403 = vmatprep.subr.mxu0 0.0
    %404 = vmatpush1.msra.mxu0 0.0
    %405 = vmatprep.subr.mxu0 0.0
    %406 = vmatpush1.msra.mxu0 0.0
    %407 = vmatprep.subr.mxu0 0.0
    %408 = vmatpush1.msra.mxu0 0.0
    %409 = vmatprep.subr.mxu0 0.0
    %410 = vmatpush1.msra.mxu0 0.0
    %411 = vmatprep.subr.mxu0 0.0
    %412 = vmatpush1.msra.mxu0 0.0
    %413 = vmatprep.subr.mxu0 0.0
    %414 = vmatpush1.msra.mxu0 0.0
    %415 = vmatprep.subr.mxu0 0.0
    %416 = vmatpush1.msra.mxu0 0.0
    %417 = vmatprep.subr.mxu0 0.0
    %418 = vmatpush1.msra.mxu0 0.0
    %419 = vmatprep.subr.mxu0 0.0
    %420 = vmatpush1.msra.mxu0 0.0
    %421 = vmatprep.subr.mxu0 0.0
    %422 = vmatpush1.msra.mxu0 0.0
    %423 = vmatprep.subr.mxu0 0.0
    %424 = vmatpush1.msra.mxu0 0.0
    %425 = vmatprep.subr.mxu0 0.0
    %426 = vmatpush1.msra.mxu0 0.0
    %427 = vmatprep.subr.mxu0 0.0
    %428 = vmatpush1.msra.mxu0 0.0
    %429 = vmatprep.subr.mxu0 0.0
    %430 = vmatpush1.msra.mxu0 0.0
    %431 = vmatprep.subr.mxu0 0.0
    %432 = vmatpush1.msra.mxu0 0.0
    %433 = vmatprep.subr.mxu0 0.0
    %434 = vmatpush1.msra.mxu0 0.0
    %435 = vmatprep.subr.mxu0 0.0
    %436 = vmatpush1.msra.mxu0 0.0
    %437 = vmatprep.subr.mxu0 0.0
    %438 = vmatpush1.msra.mxu0 0.0
    %439 = vmatprep.subr.mxu0 0.0
    %440 = vmatpush1.msra.mxu0 0.0
    %441 = vmatprep.subr.mxu0 0.0
    %442 = vmatpush1.msra.mxu0 0.0
    %443 = vmatprep.subr.mxu0 0.0
    %444 = vmatpush1.msra.mxu0 0.0
    %445 = vmatprep.subr.mxu0 0.0
    %446 = vmatpush1.msra.mxu0 0.0
    %447 = vmatprep.mubr.f32.mxu0 0.0
    %448 = vmatmul.mubr.f32.gmra.mrb[0].mxu0 %v381
    %v449 = vpop.f32.mrb[0].mxu0
    %v450 = vadd.f32 0.0, %v449
    %v451 = vpop.f32.mrb[0].mxu0
    %452 = vdwg.mxu0
    %453 = vrot.lane.b32.xlu0 %v163, 64
    %v454 = vpop.permute.xlu0 %453
    %v457 = vsel %vm203, %v376, 0
    %459 = vmatprep.subr.mxu0 0.0
    %460 = vmatpush1.msra.mxu0 %v454
    %461 = vmatprep.subr.mxu0 0.0
    %462 = vmatpush1.msra.mxu0 0.0
    %463 = vmatprep.subr.mxu0 0.0
    %464 = vmatpush1.msra.mxu0 0.0
    %465 = vmatprep.subr.mxu0 0.0
    %466 = vmatpush1.msra.mxu0 0.0
    %467 = vmatprep.subr.mxu0 0.0
    %468 = vmatpush1.msra.mxu0 0.0
    %469 = vmatprep.subr.mxu0 0.0
    %470 = vmatpush1.msra.mxu0 0.0
    %471 = vmatprep.subr.mxu0 0.0
    %472 = vmatpush1.msra.mxu0 0.0
    %473 = vmatprep.subr.mxu0 0.0
    %474 = vmatpush1.msra.mxu0 0.0
    %475 = vmatprep.subr.mxu0 0.0
    %476 = vmatpush1.msra.mxu0 0.0
    %477 = vmatprep.subr.mxu0 0.0
    %478 = vmatpush1.msra.mxu0 0.0
    %479 = vmatprep.subr.mxu0 0.0
    %480 = vmatpush1.msra.mxu0 0.0
    %481 = vmatprep.subr.mxu0 0.0
    %482 = vmatpush1.msra.mxu0 0.0
    %483 = vmatprep.subr.mxu0 0.0
    %484 = vmatpush1.msra.mxu0 0.0
    %485 = vmatprep.subr.mxu0 0.0
    %486 = vmatpush1.msra.mxu0 0.0
    %487 = vmatprep.subr.mxu0 0.0
    %488 = vmatpush1.msra.mxu0 0.0
    %489 = vmatprep.subr.mxu0 0.0
    %490 = vmatpush1.msra.mxu0 0.0
    %491 = vmatprep.subr.mxu0 0.0
    %492 = vmatpush1.msra.mxu0 0.0
    %493 = vmatprep.subr.mxu0 0.0
    %494 = vmatpush1.msra.mxu0 0.0
    %495 = vmatprep.subr.mxu0 0.0
    %496 = vmatpush1.msra.mxu0 0.0
    %497 = vmatprep.subr.mxu0 0.0
    %498 = vmatpush1.msra.mxu0 0.0
    %499 = vmatprep.subr.mxu0 0.0
    %500 = vmatpush1.msra.mxu0 0.0
    %501 = vmatprep.subr.mxu0 0.0
    %502 = vmatpush1.msra.mxu0 0.0
    %503 = vmatprep.subr.mxu0 0.0
    %504 = vmatpush1.msra.mxu0 0.0
    %505 = vmatprep.subr.mxu0 0.0
    %506 = vmatpush1.msra.mxu0 0.0
    %507 = vmatprep.subr.mxu0 0.0
    %508 = vmatpush1.msra.mxu0 0.0
    %509 = vmatprep.subr.mxu0 0.0
    %510 = vmatpush1.msra.mxu0 0.0
    %511 = vmatprep.subr.mxu0 0.0
    %512 = vmatpush1.msra.mxu0 0.0
    %513 = vmatprep.subr.mxu0 0.0
    %514 = vmatpush1.msra.mxu0 0.0
    %515 = vmatprep.subr.mxu0 0.0
    %516 = vmatpush1.msra.mxu0 0.0
    %517 = vmatprep.subr.mxu0 0.0
    %518 = vmatpush1.msra.mxu0 0.0
    %519 = vmatprep.subr.mxu0 0.0
    %520 = vmatpush1.msra.mxu0 0.0
    %521 = vmatprep.subr.mxu0 0.0
    %522 = vmatpush1.msra.mxu0 0.0
    %523 = vmatprep.mubr.f32.mxu0 0.0
    %524 = vmatmul.mubr.f32.gmra.mrb[0].mxu0 %v457
    %v525 = vpop.f32.mrb[0].mxu0
    %v526 = vadd.f32 0.0, %v525
    %v527 = vpop.f32.mrb[0].mxu0
    %528 = vdwg.mxu0
    %529 = vrot.lane.b32.xlu0 %v158, 120
    %v530 = vpop.permute.xlu0 %529
    %531 = vrot.lane.b32.xlu0 %v158, 88
    %v532 = vpop.permute.xlu0 %531
    %v533 = vsel %vm203, %v530, 0
    %v535 = vsel %vm203, %v532, 0
    %537 = vmatprep.subr.mxu0 0.0
    %538 = vmatpush1.xpose.msra.mxu0 %v535
    %539 = vmatprep.subr.mxu0 0.0
    %540 = vmatpush1.xpose.msra.mxu0 0.0
    %541 = vmatprep.subr.mxu0 0.0
    %542 = vmatpush1.xpose.msra.mxu0 0.0
    %543 = vmatprep.subr.mxu0 0.0
    %544 = vmatpush1.xpose.msra.mxu0 0.0
    %545 = vmatprep.subr.mxu0 0.0
    %546 = vmatpush1.xpose.msra.mxu0 0.0
    %547 = vmatprep.subr.mxu0 0.0
    %548 = vmatpush1.xpose.msra.mxu0 0.0
    %549 = vmatprep.subr.mxu0 0.0
    %550 = vmatpush1.xpose.msra.mxu0 0.0
    %551 = vmatprep.subr.mxu0 0.0
    %552 = vmatpush1.xpose.msra.mxu0 0.0
    %553 = vmatprep.subr.mxu0 0.0
    %554 = vmatpush1.xpose.msra.mxu0 0.0
    %555 = vmatprep.subr.mxu0 0.0
    %556 = vmatpush1.xpose.msra.mxu0 0.0
    %557 = vmatprep.subr.mxu0 0.0
    %558 = vmatpush1.xpose.msra.mxu0 0.0
    %559 = vmatprep.subr.mxu0 0.0
    %560 = vmatpush1.xpose.msra.mxu0 0.0
    %561 = vmatprep.subr.mxu0 0.0
    %562 = vmatpush1.xpose.msra.mxu0 0.0
    %563 = vmatprep.subr.mxu0 0.0
    %564 = vmatpush1.xpose.msra.mxu0 0.0
    %565 = vmatprep.subr.mxu0 0.0
    %566 = vmatpush1.xpose.msra.mxu0 0.0
    %567 = vmatprep.subr.mxu0 0.0
    %568 = vmatpush1.xpose.msra.mxu0 0.0
    %569 = vmatprep.subr.mxu0 0.0
    %570 = vmatpush1.xpose.msra.mxu0 0.0
    %571 = vmatprep.subr.mxu0 0.0
    %572 = vmatpush1.xpose.msra.mxu0 0.0
    %573 = vmatprep.subr.mxu0 0.0
    %574 = vmatpush1.xpose.msra.mxu0 0.0
    %575 = vmatprep.subr.mxu0 0.0
    %576 = vmatpush1.xpose.msra.mxu0 0.0
    %577 = vmatprep.subr.mxu0 0.0
    %578 = vmatpush1.xpose.msra.mxu0 0.0
    %579 = vmatprep.subr.mxu0 0.0
    %580 = vmatpush1.xpose.msra.mxu0 0.0
    %581 = vmatprep.subr.mxu0 0.0
    %582 = vmatpush1.xpose.msra.mxu0 0.0
    %583 = vmatprep.subr.mxu0 0.0
    %584 = vmatpush1.xpose.msra.mxu0 0.0
    %585 = vmatprep.subr.mxu0 0.0
    %586 = vmatpush1.xpose.msra.mxu0 0.0
    %587 = vmatprep.subr.mxu0 0.0
    %588 = vmatpush1.xpose.msra.mxu0 0.0
    %589 = vmatprep.subr.mxu0 0.0
    %590 = vmatpush1.xpose.msra.mxu0 0.0
    %591 = vmatprep.subr.mxu0 0.0
    %592 = vmatpush1.xpose.msra.mxu0 0.0
    %593 = vmatprep.subr.mxu0 0.0
    %594 = vmatpush1.xpose.msra.mxu0 0.0
    %595 = vmatprep.subr.mxu0 0.0
    %596 = vmatpush1.xpose.msra.mxu0 0.0
    %597 = vmatprep.subr.mxu0 0.0
    %598 = vmatpush1.xpose.msra.mxu0 0.0
    %599 = vmatprep.subr.mxu0 0.0
    %600 = vmatpush1.xpose.msra.mxu0 0.0
    %601 = vmatprep.mubr.f32.mxu0 0.0
    %602 = vmatmul.mubr.f32.gmra.mrb[0].mxu0 %v533
    %v603 = vpop.f32.mrb[0].mxu0
    %v604 = vadd.f32 %v193, %v603
    %v605 = vpop.f32.mrb[0].mxu0
    %606 = vdwg.mxu0
    %607 = vrot.lane.b32.xlu0 %v163, 120
    %v608 = vpop.permute.xlu0 %607
    %609 = vrot.lane.b32.xlu0 %v163, 88
    %v610 = vpop.permute.xlu0 %609
    %v611 = vsel %vm203, %v608, 0
    %v613 = vsel %vm203, %v610, 0
    %615 = vmatprep.subr.mxu0 0.0
    %616 = vmatpush1.xpose.msra.mxu0 %v613
    %617 = vmatprep.subr.mxu0 0.0
    %618 = vmatpush1.xpose.msra.mxu0 0.0
    %619 = vmatprep.subr.mxu0 0.0
    %620 = vmatpush1.xpose.msra.mxu0 0.0
    %621 = vmatprep.subr.mxu0 0.0
    %622 = vmatpush1.xpose.msra.mxu0 0.0
    %623 = vmatprep.subr.mxu0 0.0
    %624 = vmatpush1.xpose.msra.mxu0 0.0
    %625 = vmatprep.subr.mxu0 0.0
    %626 = vmatpush1.xpose.msra.mxu0 0.0
    %627 = vmatprep.subr.mxu0 0.0
    %628 = vmatpush1.xpose.msra.mxu0 0.0
    %629 = vmatprep.subr.mxu0 0.0
    %630 = vmatpush1.xpose.msra.mxu0 0.0
    %631 = vmatprep.subr.mxu0 0.0
    %632 = vmatpush1.xpose.msra.mxu0 0.0
    %633 = vmatprep.subr.mxu0 0.0
    %634 = vmatpush1.xpose.msra.mxu0 0.0
    %635 = vmatprep.subr.mxu0 0.0
    %636 = vmatpush1.xpose.msra.mxu0 0.0
    %637 = vmatprep.subr.mxu0 0.0
    %638 = vmatpush1.xpose.msra.mxu0 0.0
    %639 = vmatprep.subr.mxu0 0.0
    %640 = vmatpush1.xpose.msra.mxu0 0.0
    %641 = vmatprep.subr.mxu0 0.0
    %642 = vmatpush1.xpose.msra.mxu0 0.0
    %643 = vmatprep.subr.mxu0 0.0
    %644 = vmatpush1.xpose.msra.mxu0 0.0
    %645 = vmatprep.subr.mxu0 0.0
    %646 = vmatpush1.xpose.msra.mxu0 0.0
    %647 = vmatprep.subr.mxu0 0.0
    %648 = vmatpush1.xpose.msra.mxu0 0.0
    %649 = vmatprep.subr.mxu0 0.0
    %650 = vmatpush1.xpose.msra.mxu0 0.0
    %651 = vmatprep.subr.mxu0 0.0
    %652 = vmatpush1.xpose.msra.mxu0 0.0
    %653 = vmatprep.subr.mxu0 0.0
    %654 = vmatpush1.xpose.msra.mxu0 0.0
    %655 = vmatprep.subr.mxu0 0.0
    %656 = vmatpush1.xpose.msra.mxu0 0.0
    %657 = vmatprep.subr.mxu0 0.0
    %658 = vmatpush1.xpose.msra.mxu0 0.0
    %659 = vmatprep.subr.mxu0 0.0
    %660 = vmatpush1.xpose.msra.mxu0 0.0
    %661 = vmatprep.subr.mxu0 0.0
    %662 = vmatpush1.xpose.msra.mxu0 0.0
    %663 = vmatprep.subr.mxu0 0.0
    %664 = vmatpush1.xpose.msra.mxu0 0.0
    %665 = vmatprep.subr.mxu0 0.0
    %666 = vmatpush1.xpose.msra.mxu0 0.0
    %667 = vmatprep.subr.mxu0 0.0
    %668 = vmatpush1.xpose.msra.mxu0 0.0
    %669 = vmatprep.subr.mxu0 0.0
    %670 = vmatpush1.xpose.msra.mxu0 0.0
    %671 = vmatprep.subr.mxu0 0.0
    %672 = vmatpush1.xpose.msra.mxu0 0.0
    %673 = vmatprep.subr.mxu0 0.0
    %674 = vmatpush1.xpose.msra.mxu0 0.0
    %675 = vmatprep.subr.mxu0 0.0
    %676 = vmatpush1.xpose.msra.mxu0 0.0
    %677 = vmatprep.subr.mxu0 0.0
    %678 = vmatpush1.xpose.msra.mxu0 0.0
    %679 = vmatprep.mubr.f32.mxu0 0.0
    %680 = vmatmul.mubr.f32.gmra.mrb[0].mxu0 %v611
    %v681 = vpop.f32.mrb[0].mxu0
    %v682 = vadd.f32 %v197, %v681
    %v683 = vpop.f32.mrb[0].mxu0
    %684 = vdwg.mxu0
    %v685 = vsel %vm203, %v604, -inf
    %686 = vmax.xlane.f32.xlu0 %v685
    %v687 = vpop.xlane.xlu0 %686
    %v688 = vsel %vm203, %v682, -inf
    %689 = vmax.xlane.f32.xlu0 %v688
    %v690 = vpop.xlane.xlu0 %689
    %v691 = vsub.f32 %v604, %v687
    %v692 = vsub.f32 %v682, %v690
    %v693 = vmul.f32 %v691, 1.442695
    %v694 = vpow.pop %v693
    %v695 = vmul.f32 %v692, 1.442695
    %v696 = vpow.pop %v695
    %v697 = vsel %vm203, %v694, 0.0
    %698 = vadd.xlane.f32.xlu0 %v697
    %v699 = vpop.xlane.xlu0 %698
    %v700 = vsel %vm203, %v696, 0.0
    %701 = vadd.xlane.f32.xlu0 %v700
    %v702 = vpop.xlane.xlu0 %701
    %v703 = vrcp.pop %v699
    %v704 = vrcp.pop %v702
    %v705 = vmul.f32 %v694, %v703
    %v706 = vmul.f32 %v696, %v704
    %707 = vrot.lane.b32.xlu0 %v158, 56
    %v708 = vpop.permute.xlu0 %707
    %v711 = vsel %vm203, %v705, 0
    %713 = vmatprep.subr.mxu0 0.0
    %714 = vmatpush1.msra.mxu0 %v708
    %715 = vmatprep.subr.mxu0 0.0
    %716 = vmatpush1.msra.mxu0 0.0
    %717 = vmatprep.subr.mxu0 0.0
    %718 = vmatpush1.msra.mxu0 0.0
    %719 = vmatprep.subr.mxu0 0.0
    %720 = vmatpush1.msra.mxu0 0.0
    %721 = vmatprep.subr.mxu0 0.0
    %722 = vmatpush1.msra.mxu0 0.0
    %723 = vmatprep.subr.mxu0 0.0
    %724 = vmatpush1.msra.mxu0 0.0
    %725 = vmatprep.subr.mxu0 0.0
    %726 = vmatpush1.msra.mxu0 0.0
    %727 = vmatprep.subr.mxu0 0.0
    %728 = vmatpush1.msra.mxu0 0.0
    %729 = vmatprep.subr.mxu0 0.0
    %730 = vmatpush1.msra.mxu0 0.0
    %731 = vmatprep.subr.mxu0 0.0
    %732 = vmatpush1.msra.mxu0 0.0
    %733 = vmatprep.subr.mxu0 0.0
    %734 = vmatpush1.msra.mxu0 0.0
    %735 = vmatprep.subr.mxu0 0.0
    %736 = vmatpush1.msra.mxu0 0.0
    %737 = vmatprep.subr.mxu0 0.0
    %738 = vmatpush1.msra.mxu0 0.0
    %739 = vmatprep.subr.mxu0 0.0
    %740 = vmatpush1.msra.mxu0 0.0
    %741 = vmatprep.subr.mxu0 0.0
    %742 = vmatpush1.msra.mxu0 0.0
    %743 = vmatprep.subr.mxu0 0.0
    %744 = vmatpush1.msra.mxu0 0.0
    %745 = vmatprep.subr.mxu0 0.0
    %746 = vmatpush1.msra.mxu0 0.0
    %747 = vmatprep.subr.mxu0 0.0
    %748 = vmatpush1.msra.mxu0 0.0
    %749 = vmatprep.subr.mxu0 0.0
    %750 = vmatpush1.msra.mxu0 0.0
    %751 = vmatprep.subr.mxu0 0.0
    %752 = vmatpush1.msra.mxu0 0.0
    %753 = vmatprep.subr.mxu0 0.0
    %754 = vmatpush1.msra.mxu0 0.0
    %755 = vmatprep.subr.mxu0 0.0
    %756 = vmatpush1.msra.mxu0 0.0
    %757 = vmatprep.subr.mxu0 0.0
    %758 = vmatpush1.msra.mxu0 0.0
    %759 = vmatprep.subr.mxu0 0.0
    %760 = vmatpush1.msra.mxu0 0.0
    %761 = vmatprep.subr.mxu0 0.0
    %762 = vmatpush1.msra.mxu0 0.0
    %763 = vmatprep.subr.mxu0 0.0
    %764 = vmatpush1.msra.mxu0 0.0
    %765 = vmatprep.subr.mxu0 0.0
    %766 = vmatpush1.msra.mxu0 0.0
    %767 = vmatprep.subr.mxu0 0.0
    %768 = vmatpush1.msra.mxu0 0.0
    %769 = vmatprep.subr.mxu0 0.0
    %770 = vmatpush1.msra.mxu0 0.0
    %771 = vmatprep.subr.mxu0 0.0
    %772 = vmatpush1.msra.mxu0 0.0
    %773 = vmatprep.subr.mxu0 0.0
    %774 = vmatpush1.msra.mxu0 0.0
    %775 = vmatprep.subr.mxu0 0.0
    %776 = vmatpush1.msra.mxu0 0.0
    %777 = vmatprep.mubr.f32.mxu0 0.0
    %778 = vmatmul.mubr.f32.gmra.mrb[0].mxu0 %v711
    %v779 = vpop.f32.mrb[0].mxu0
    %v780 = vadd.f32 0.0, %v779
    %v781 = vpop.f32.mrb[0].mxu0
    %782 = vdwg.mxu0
    %783 = vrot.lane.b32.xlu0 %v163, 56
    %v784 = vpop.permute.xlu0 %783
    %v787 = vsel %vm203, %v706, 0
    %789 = vmatprep.subr.mxu0 0.0
    %790 = vmatpush1.msra.mxu0 %v784
    %791 = vmatprep.subr.mxu0 0.0
    %792 = vmatpush1.msra.mxu0 0.0
    %793 = vmatprep.subr.mxu0 0.0
    %794 = vmatpush1.msra.mxu0 0.0
    %795 = vmatprep.subr.mxu0 0.0
    %796 = vmatpush1.msra.mxu0 0.0
    %797 = vmatprep.subr.mxu0 0.0
    %798 = vmatpush1.msra.mxu0 0.0
    %799 = vmatprep.subr.mxu0 0.0
    %800 = vmatpush1.msra.mxu0 0.0
    %801 = vmatprep.subr.mxu0 0.0
    %802 = vmatpush1.msra.mxu0 0.0
    %803 = vmatprep.subr.mxu0 0.0
    %804 = vmatpush1.msra.mxu0 0.0
    %805 = vmatprep.subr.mxu0 0.0
    %806 = vmatpush1.msra.mxu0 0.0
    %807 = vmatprep.subr.mxu0 0.0
    %808 = vmatpush1.msra.mxu0 0.0
    %809 = vmatprep.subr.mxu0 0.0
    %810 = vmatpush1.msra.mxu0 0.0
    %811 = vmatprep.subr.mxu0 0.0
    %812 = vmatpush1.msra.mxu0 0.0
    %813 = vmatprep.subr.mxu0 0.0
    %814 = vmatpush1.msra.mxu0 0.0
    %815 = vmatprep.subr.mxu0 0.0
    %816 = vmatpush1.msra.mxu0 0.0
    %817 = vmatprep.subr.mxu0 0.0
    %818 = vmatpush1.msra.mxu0 0.0
    %819 = vmatprep.subr.mxu0 0.0
    %820 = vmatpush1.msra.mxu0 0.0
    %821 = vmatprep.subr.mxu0 0.0
    %822 = vmatpush1.msra.mxu0 0.0
    %823 = vmatprep.subr.mxu0 0.0
    %824 = vmatpush1.msra.mxu0 0.0
    %825 = vmatprep.subr.mxu0 0.0
    %826 = vmatpush1.msra.mxu0 0.0
    %827 = vmatprep.subr.mxu0 0.0
    %828 = vmatpush1.msra.mxu0 0.0
    %829 = vmatprep.subr.mxu0 0.0
    %830 = vmatpush1.msra.mxu0 0.0
    %831 = vmatprep.subr.mxu0 0.0
    %832 = vmatpush1.msra.mxu0 0.0
    %833 = vmatprep.subr.mxu0 0.0
    %834 = vmatpush1.msra.mxu0 0.0
    %835 = vmatprep.subr.mxu0 0.0
    %836 = vmatpush1.msra.mxu0 0.0
    %837 = vmatprep.subr.mxu0 0.0
    %838 = vmatpush1.msra.mxu0 0.0
    %839 = vmatprep.subr.mxu0 0.0
    %840 = vmatpush1.msra.mxu0 0.0
    %841 = vmatprep.subr.mxu0 0.0
    %842 = vmatpush1.msra.mxu0 0.0
    %843 = vmatprep.subr.mxu0 0.0
    %844 = vmatpush1.msra.mxu0 0.0
    %845 = vmatprep.subr.mxu0 0.0
    %846 = vmatpush1.msra.mxu0 0.0
    %847 = vmatprep.subr.mxu0 0.0
    %848 = vmatpush1.msra.mxu0 0.0
    %849 = vmatprep.subr.mxu0 0.0
    %850 = vmatpush1.msra.mxu0 0.0
    %851 = vmatprep.subr.mxu0 0.0
    %852 = vmatpush1.msra.mxu0 0.0
    %853 = vmatprep.mubr.f32.mxu0 0.0
    %854 = vmatmul.mubr.f32.gmra.mrb[0].mxu0 %v787
    %v855 = vpop.f32.mrb[0].mxu0
    %v856 = vadd.f32 0.0, %v855
    %v857 = vpop.f32.mrb[0].mxu0
    %858 = vdwg.mxu0
    %859 = vrot.lane.b32.xlu0 %v158, 112
    %v860 = vpop.permute.xlu0 %859
    %861 = vrot.lane.b32.xlu0 %v158, 80
    %v862 = vpop.permute.xlu0 %861
    %v863 = vsel %vm203, %v860, 0
    %v865 = vsel %vm203, %v862, 0
    %867 = vmatprep.subr.mxu0 0.0
    %868 = vmatpush1.xpose.msra.mxu0 %v865
    %869 = vmatprep.subr.mxu0 0.0
    %870 = vmatpush1.xpose.msra.mxu0 0.0
    %871 = vmatprep.subr.mxu0 0.0
    %872 = vmatpush1.xpose.msra.mxu0 0.0
    %873 = vmatprep.subr.mxu0 0.0
    %874 = vmatpush1.xpose.msra.mxu0 0.0
    %875 = vmatprep.subr.mxu0 0.0
    %876 = vmatpush1.xpose.msra.mxu0 0.0
    %877 = vmatprep.subr.mxu0 0.0
    %878 = vmatpush1.xpose.msra.mxu0 0.0
    %879 = vmatprep.subr.mxu0 0.0
    %880 = vmatpush1.xpose.msra.mxu0 0.0
    %881 = vmatprep.subr.mxu0 0.0
    %882 = vmatpush1.xpose.msra.mxu0 0.0
    %883 = vmatprep.subr.mxu0 0.0
    %884 = vmatpush1.xpose.msra.mxu0 0.0
    %885 = vmatprep.subr.mxu0 0.0
    %886 = vmatpush1.xpose.msra.mxu0 0.0
    %887 = vmatprep.subr.mxu0 0.0
    %888 = vmatpush1.xpose.msra.mxu0 0.0
    %889 = vmatprep.subr.mxu0 0.0
    %890 = vmatpush1.xpose.msra.mxu0 0.0
    %891 = vmatprep.subr.mxu0 0.0
    %892 = vmatpush1.xpose.msra.mxu0 0.0
    %893 = vmatprep.subr.mxu0 0.0
    %894 = vmatpush1.xpose.msra.mxu0 0.0
    %895 = vmatprep.subr.mxu0 0.0
    %896 = vmatpush1.xpose.msra.mxu0 0.0
    %897 = vmatprep.subr.mxu0 0.0
    %898 = vmatpush1.xpose.msra.mxu0 0.0
    %899 = vmatprep.subr.mxu0 0.0
    %900 = vmatpush1.xpose.msra.mxu0 0.0
    %901 = vmatprep.subr.mxu0 0.0
    %902 = vmatpush1.xpose.msra.mxu0 0.0
    %903 = vmatprep.subr.mxu0 0.0
    %904 = vmatpush1.xpose.msra.mxu0 0.0
    %905 = vmatprep.subr.mxu0 0.0
    %906 = vmatpush1.xpose.msra.mxu0 0.0
    %907 = vmatprep.subr.mxu0 0.0
    %908 = vmatpush1.xpose.msra.mxu0 0.0
    %909 = vmatprep.subr.mxu0 0.0
    %910 = vmatpush1.xpose.msra.mxu0 0.0
    %911 = vmatprep.subr.mxu0 0.0
    %912 = vmatpush1.xpose.msra.mxu0 0.0
    %913 = vmatprep.subr.mxu0 0.0
    %914 = vmatpush1.xpose.msra.mxu0 0.0
    %915 = vmatprep.subr.mxu0 0.0
    %916 = vmatpush1.xpose.msra.mxu0 0.0
    %917 = vmatprep.subr.mxu0 0.0
    %918 = vmatpush1.xpose.msra.mxu0 0.0
    %919 = vmatprep.subr.mxu0 0.0
    %920 = vmatpush1.xpose.msra.mxu0 0.0
    %921 = vmatprep.subr.mxu0 0.0
    %922 = vmatpush1.xpose.msra.mxu0 0.0
    %923 = vmatprep.subr.mxu0 0.0
    %924 = vmatpush1.xpose.msra.mxu0 0.0
    %925 = vmatprep.subr.mxu0 0.0
    %926 = vmatpush1.xpose.msra.mxu0 0.0
    %927 = vmatprep.subr.mxu0 0.0
    %928 = vmatpush1.xpose.msra.mxu0 0.0
    %929 = vmatprep.subr.mxu0 0.0
    %930 = vmatpush1.xpose.msra.mxu0 0.0
    %931 = vmatprep.mubr.f32.mxu0 0.0
    %932 = vmatmul.mubr.f32.gmra.mrb[0].mxu0 %v863
    %v933 = vpop.f32.mrb[0].mxu0
    %v934 = vadd.f32 %v193, %v933
    %v935 = vpop.f32.mrb[0].mxu0
    %936 = vdwg.mxu0
    %937 = vrot.lane.b32.xlu0 %v163, 112
    %v938 = vpop.permute.xlu0 %937
    %939 = vrot.lane.b32.xlu0 %v163, 80
    %v940 = vpop.permute.xlu0 %939
    %v941 = vsel %vm203, %v938, 0
    %v943 = vsel %vm203, %v940, 0
    %945 = vmatprep.subr.mxu0 0.0
    %946 = vmatpush1.xpose.msra.mxu0 %v943
    %947 = vmatprep.subr.mxu0 0.0
    %948 = vmatpush1.xpose.msra.mxu0 0.0
    %949 = vmatprep.subr.mxu0 0.0
    %950 = vmatpush1.xpose.msra.mxu0 0.0
    %951 = vmatprep.subr.mxu0 0.0
    %952 = vmatpush1.xpose.msra.mxu0 0.0
    %953 = vmatprep.subr.mxu0 0.0
    %954 = vmatpush1.xpose.msra.mxu0 0.0
    %955 = vmatprep.subr.mxu0 0.0
    %956 = vmatpush1.xpose.msra.mxu0 0.0
    %957 = vmatprep.subr.mxu0 0.0
    %958 = vmatpush1.xpose.msra.mxu0 0.0
    %959 = vmatprep.subr.mxu0 0.0
    %960 = vmatpush1.xpose.msra.mxu0 0.0
    %961 = vmatprep.subr.mxu0 0.0
    %962 = vmatpush1.xpose.msra.mxu0 0.0
    %963 = vmatprep.subr.mxu0 0.0
    %964 = vmatpush1.xpose.msra.mxu0 0.0
    %965 = vmatprep.subr.mxu0 0.0
    %966 = vmatpush1.xpose.msra.mxu0 0.0
    %967 = vmatprep.subr.mxu0 0.0
    %968 = vmatpush1.xpose.msra.mxu0 0.0
    %969 = vmatprep.subr.mxu0 0.0
    %970 = vmatpush1.xpose.msra.mxu0 0.0
    %971 = vmatprep.subr.mxu0 0.0
    %972 = vmatpush1.xpose.msra.mxu0 0.0
    %973 = vmatprep.subr.mxu0 0.0
    %974 = vmatpush1.xpose.msra.mxu0 0.0
    %975 = vmatprep.subr.mxu0 0.0
    %976 = vmatpush1.xpose.msra.mxu0 0.0
    %977 = vmatprep.subr.mxu0 0.0
    %978 = vmatpush1.xpose.msra.mxu0 0.0
    %979 = vmatprep.subr.mxu0 0.0
    %980 = vmatpush1.xpose.msra.mxu0 0.0
    %981 = vmatprep.subr.mxu0 0.0
    %982 = vmatpush1.xpose.msra.mxu0 0.0
    %983 = vmatprep.subr.mxu0 0.0
    %984 = vmatpush1.xpose.msra.mxu0 0.0
    %985 = vmatprep.subr.mxu0 0.0
    %986 = vmatpush1.xpose.msra.mxu0 0.0
    %987 = vmatprep.subr.mxu0 0.0
    %988 = vmatpush1.xpose.msra.mxu0 0.0
    %989 = vmatprep.subr.mxu0 0.0
    %990 = vmatpush1.xpose.msra.mxu0 0.0
    %991 = vmatprep.subr.mxu0 0.0
    %992 = vmatpush1.xpose.msra.mxu0 0.0
    %993 = vmatprep.subr.mxu0 0.0
    %994 = vmatpush1.xpose.msra.mxu0 0.0
    %995 = vmatprep.subr.mxu0 0.0
    %996 = vmatpush1.xpose.msra.mxu0 0.0
    %997 = vmatprep.subr.mxu0 0.0
    %998 = vmatpush1.xpose.msra.mxu0 0.0
    %999 = vmatprep.subr.mxu0 0.0
    %1000 = vmatpush1.xpose.msra.mxu0 0.0
    %1001 = vmatprep.subr.mxu0 0.0
    %1002 = vmatpush1.xpose.msra.mxu0 0.0
    %1003 = vmatprep.subr.mxu0 0.0
    %1004 = vmatpush1.xpose.msra.mxu0 0.0
    %1005 = vmatprep.subr.mxu0 0.0
    %1006 = vmatpush1.xpose.msra.mxu0 0.0
    %1007 = vmatprep.subr.mxu0 0.0
    %1008 = vmatpush1.xpose.msra.mxu0 0.0
    %1009 = vmatprep.mubr.f32.mxu0 0.0
    %1010 = vmatmul.mubr.f32.gmra.mrb[0].mxu0 %v941
    %v1011 = vpop.f32.mrb[0].mxu0
    %v1012 = vadd.f32 %v197, %v1011
    %v1013 = vpop.f32.mrb[0].mxu0
    %1014 = vdwg.mxu0
    %v1015 = vsel %vm203, %v934, -inf
    %1016 = vmax.xlane.f32.xlu0 %v1015
    %v1017 = vpop.xlane.xlu0 %1016
    %v1018 = vsel %vm203, %v1012, -inf
    %1019 = vmax.xlane.f32.xlu0 %v1018
    %v1020 = vpop.xlane.xlu0 %1019
    %v1021 = vsub.f32 %v934, %v1017
    %v1022 = vsub.f32 %v1012, %v1020
    %v1023 = vmul.f32 %v1021, 1.442695
    %v1024 = vpow.pop %v1023
    %v1025 = vmul.f32 %v1022, 1.442695
    %v1026 = vpow.pop %v1025
    %v1027 = vsel %vm203, %v1024, 0.0
    %1028 = vadd.xlane.f32.xlu0 %v1027
    %v1029 = vpop.xlane.xlu0 %1028
    %v1030 = vsel %vm203, %v1026, 0.0
    %1031 = vadd.xlane.f32.xlu0 %v1030
    %v1032 = vpop.xlane.xlu0 %1031
    %v1033 = vrcp.pop %v1029
    %v1034 = vrcp.pop %v1032
    %v1035 = vmul.f32 %v1024, %v1033
    %v1036 = vmul.f32 %v1026, %v1034
    %1037 = vrot.lane.b32.xlu0 %v158, 48
    %v1038 = vpop.permute.xlu0 %1037
    %v1041 = vsel %vm203, %v1035, 0
    %1043 = vmatprep.subr.mxu0 0.0
    %1044 = vmatpush1.msra.mxu0 %v1038
    %1045 = vmatprep.subr.mxu0 0.0
    %1046 = vmatpush1.msra.mxu0 0.0
    %1047 = vmatprep.subr.mxu0 0.0
    %1048 = vmatpush1.msra.mxu0 0.0
    %1049 = vmatprep.subr.mxu0 0.0
    %1050 = vmatpush1.msra.mxu0 0.0
    %1051 = vmatprep.subr.mxu0 0.0
    %1052 = vmatpush1.msra.mxu0 0.0
    %1053 = vmatprep.subr.mxu0 0.0
    %1054 = vmatpush1.msra.mxu0 0.0
    %1055 = vmatprep.subr.mxu0 0.0
    %1056 = vmatpush1.msra.mxu0 0.0
    %1057 = vmatprep.subr.mxu0 0.0
    %1058 = vmatpush1.msra.mxu0 0.0
    %1059 = vmatprep.subr.mxu0 0.0
    %1060 = vmatpush1.msra.mxu0 0.0
    %1061 = vmatprep.subr.mxu0 0.0
    %1062 = vmatpush1.msra.mxu0 0.0
    %1063 = vmatprep.subr.mxu0 0.0
    %1064 = vmatpush1.msra.mxu0 0.0
    %1065 = vmatprep.subr.mxu0 0.0
    %1066 = vmatpush1.msra.mxu0 0.0
    %1067 = vmatprep.subr.mxu0 0.0
    %1068 = vmatpush1.msra.mxu0 0.0
    %1069 = vmatprep.subr.mxu0 0.0
    %1070 = vmatpush1.msra.mxu0 0.0
    %1071 = vmatprep.subr.mxu0 0.0
    %1072 = vmatpush1.msra.mxu0 0.0
    %1073 = vmatprep.subr.mxu0 0.0
    %1074 = vmatpush1.msra.mxu0 0.0
    %1075 = vmatprep.subr.mxu0 0.0
    %1076 = vmatpush1.msra.mxu0 0.0
    %1077 = vmatprep.subr.mxu0 0.0
    %1078 = vmatpush1.msra.mxu0 0.0
    %1079 = vmatprep.subr.mxu0 0.0
    %1080 = vmatpush1.msra.mxu0 0.0
    %1081 = vmatprep.subr.mxu0 0.0
    %1082 = vmatpush1.msra.mxu0 0.0
    %1083 = vmatprep.subr.mxu0 0.0
    %1084 = vmatpush1.msra.mxu0 0.0
    %1085 = vmatprep.subr.mxu0 0.0
    %1086 = vmatpush1.msra.mxu0 0.0
    %1087 = vmatprep.subr.mxu0 0.0
    %1088 = vmatpush1.msra.mxu0 0.0
    %1089 = vmatprep.subr.mxu0 0.0
    %1090 = vmatpush1.msra.mxu0 0.0
    %1091 = vmatprep.subr.mxu0 0.0
    %1092 = vmatpush1.msra.mxu0 0.0
    %1093 = vmatprep.subr.mxu0 0.0
    %1094 = vmatpush1.msra.mxu0 0.0
    %1095 = vmatprep.subr.mxu0 0.0
    %1096 = vmatpush1.msra.mxu0 0.0
    %1097 = vmatprep.subr.mxu0 0.0
    %1098 = vmatpush1.msra.mxu0 0.0
    %1099 = vmatprep.subr.mxu0 0.0
    %1100 = vmatpush1.msra.mxu0 0.0
    %1101 = vmatprep.subr.mxu0 0.0
    %1102 = vmatpush1.msra.mxu0 0.0
    %1103 = vmatprep.subr.mxu0 0.0
    %1104 = vmatpush1.msra.mxu0 0.0
    %1105 = vmatprep.subr.mxu0 0.0
    %1106 = vmatpush1.msra.mxu0 0.0
    %1107 = vmatprep.mubr.f32.mxu0 0.0
    %1108 = vmatmul.mubr.f32.gmra.mrb[0].mxu0 %v1041
    %v1109 = vpop.f32.mrb[0].mxu0
    %v1110 = vadd.f32 0.0, %v1109
    %v1111 = vpop.f32.mrb[0].mxu0
    %1112 = vdwg.mxu0
    %1113 = vrot.lane.b32.xlu0 %v163, 48
    %v1114 = vpop.permute.xlu0 %1113
    %v1117 = vsel %vm203, %v1036, 0
    %1119 = vmatprep.subr.mxu0 0.0
    %1120 = vmatpush1.msra.mxu0 %v1114
    %1121 = vmatprep.subr.mxu0 0.0
    %1122 = vmatpush1.msra.mxu0 0.0
    %1123 = vmatprep.subr.mxu0 0.0
    %1124 = vmatpush1.msra.mxu0 0.0
    %1125 = vmatprep.subr.mxu0 0.0
    %1126 = vmatpush1.msra.mxu0 0.0
    %1127 = vmatprep.subr.mxu0 0.0
    %1128 = vmatpush1.msra.mxu0 0.0
    %1129 = vmatprep.subr.mxu0 0.0
    %1130 = vmatpush1.msra.mxu0 0.0
    %1131 = vmatprep.subr.mxu0 0.0
    %1132 = vmatpush1.msra.mxu0 0.0
    %1133 = vmatprep.subr.mxu0 0.0
    %1134 = vmatpush1.msra.mxu0 0.0
    %1135 = vmatprep.subr.mxu0 0.0
    %1136 = vmatpush1.msra.mxu0 0.0
    %1137 = vmatprep.subr.mxu0 0.0
    %1138 = vmatpush1.msra.mxu0 0.0
    %1139 = vmatprep.subr.mxu0 0.0
    %1140 = vmatpush1.msra.mxu0 0.0
    %1141 = vmatprep.subr.mxu0 0.0
    %1142 = vmatpush1.msra.mxu0 0.0
    %1143 = vmatprep.subr.mxu0 0.0
    %1144 = vmatpush1.msra.mxu0 0.0
    %1145 = vmatprep.subr.mxu0 0.0
    %1146 = vmatpush1.msra.mxu0 0.0
    %1147 = vmatprep.subr.mxu0 0.0
    %1148 = vmatpush1.msra.mxu0 0.0
    %1149 = vmatprep.subr.mxu0 0.0
    %1150 = vmatpush1.msra.mxu0 0.0
    %1151 = vmatprep.subr.mxu0 0.0
    %1152 = vmatpush1.msra.mxu0 0.0
    %1153 = vmatprep.subr.mxu0 0.0
    %1154 = vmatpush1.msra.mxu0 0.0
    %1155 = vmatprep.subr.mxu0 0.0
    %1156 = vmatpush1.msra.mxu0 0.0
    %1157 = vmatprep.subr.mxu0 0.0
    %1158 = vmatpush1.msra.mxu0 0.0
    %1159 = vmatprep.subr.mxu0 0.0
    %1160 = vmatpush1.msra.mxu0 0.0
    %1161 = vmatprep.subr.mxu0 0.0
    %1162 = vmatpush1.msra.mxu0 0.0
    %1163 = vmatprep.subr.mxu0 0.0
    %1164 = vmatpush1.msra.mxu0 0.0
    %1165 = vmatprep.subr.mxu0 0.0
    %1166 = vmatpush1.msra.mxu0 0.0
    %1167 = vmatprep.subr.mxu0 0.0
    %1168 = vmatpush1.msra.mxu0 0.0
    %1169 = vmatprep.subr.mxu0 0.0
    %1170 = vmatpush1.msra.mxu0 0.0
    %1171 = vmatprep.subr.mxu0 0.0
    %1172 = vmatpush1.msra.mxu0 0.0
    %1173 = vmatprep.subr.mxu0 0.0
    %1174 = vmatpush1.msra.mxu0 0.0
    %1175 = vmatprep.subr.mxu0 0.0
    %1176 = vmatpush1.msra.mxu0 0.0
    %1177 = vmatprep.subr.mxu0 0.0
    %1178 = vmatpush1.msra.mxu0 0.0
    %1179 = vmatprep.subr.mxu0 0.0
    %1180 = vmatpush1.msra.mxu0 0.0
    %1181 = vmatprep.subr.mxu0 0.0
    %1182 = vmatpush1.msra.mxu0 0.0
    %1183 = vmatprep.mubr.f32.mxu0 0.0
    %1184 = vmatmul.mubr.f32.gmra.mrb[0].mxu0 %v1117
    %v1185 = vpop.f32.mrb[0].mxu0
    %v1186 = vadd.f32 0.0, %v1185
    %v1187 = vpop.f32.mrb[0].mxu0
    %1188 = vdwg.mxu0
    %1189 = vrot.lane.b32.xlu0 %v158, 104
    %v1190 = vpop.permute.xlu0 %1189
    %1191 = vrot.lane.b32.xlu0 %v158, 72
    %v1192 = vpop.permute.xlu0 %1191
    %v1193 = vsel %vm203, %v1190, 0
    %v1195 = vsel %vm203, %v1192, 0
    %1197 = vmatprep.subr.mxu0 0.0
    %1198 = vmatpush1.xpose.msra.mxu0 %v1195
    %1199 = vmatprep.subr.mxu0 0.0
    %1200 = vmatpush1.xpose.msra.mxu0 0.0
    %1201 = vmatprep.subr.mxu0 0.0
    %1202 = vmatpush1.xpose.msra.mxu0 0.0
    %1203 = vmatprep.subr.mxu0 0.0
    %1204 = vmatpush1.xpose.msra.mxu0 0.0
    %1205 = vmatprep.subr.mxu0 0.0
    %1206 = vmatpush1.xpose.msra.mxu0 0.0
    %1207 = vmatprep.subr.mxu0 0.0
    %1208 = vmatpush1.xpose.msra.mxu0 0.0
    %1209 = vmatprep.subr.mxu0 0.0
    %1210 = vmatpush1.xpose.msra.mxu0 0.0
    %1211 = vmatprep.subr.mxu0 0.0
    %1212 = vmatpush1.xpose.msra.mxu0 0.0
    %1213 = vmatprep.subr.mxu0 0.0
    %1214 = vmatpush1.xpose.msra.mxu0 0.0
    %1215 = vmatprep.subr.mxu0 0.0
    %1216 = vmatpush1.xpose.msra.mxu0 0.0
    %1217 = vmatprep.subr.mxu0 0.0
    %1218 = vmatpush1.xpose.msra.mxu0 0.0
    %1219 = vmatprep.subr.mxu0 0.0
    %1220 = vmatpush1.xpose.msra.mxu0 0.0
    %1221 = vmatprep.subr.mxu0 0.0
    %1222 = vmatpush1.xpose.msra.mxu0 0.0
    %1223 = vmatprep.subr.mxu0 0.0
    %1224 = vmatpush1.xpose.msra.mxu0 0.0
    %1225 = vmatprep.subr.mxu0 0.0
    %1226 = vmatpush1.xpose.msra.mxu0 0.0
    %1227 = vmatprep.subr.mxu0 0.0
    %1228 = vmatpush1.xpose.msra.mxu0 0.0
    %1229 = vmatprep.subr.mxu0 0.0
    %1230 = vmatpush1.xpose.msra.mxu0 0.0
    %1231 = vmatprep.subr.mxu0 0.0
    %1232 = vmatpush1.xpose.msra.mxu0 0.0
    %1233 = vmatprep.subr.mxu0 0.0
    %1234 = vmatpush1.xpose.msra.mxu0 0.0
    %1235 = vmatprep.subr.mxu0 0.0
    %1236 = vmatpush1.xpose.msra.mxu0 0.0
    %1237 = vmatprep.subr.mxu0 0.0
    %1238 = vmatpush1.xpose.msra.mxu0 0.0
    %1239 = vmatprep.subr.mxu0 0.0
    %1240 = vmatpush1.xpose.msra.mxu0 0.0
    %1241 = vmatprep.subr.mxu0 0.0
    %1242 = vmatpush1.xpose.msra.mxu0 0.0
    %1243 = vmatprep.subr.mxu0 0.0
    %1244 = vmatpush1.xpose.msra.mxu0 0.0
    %1245 = vmatprep.subr.mxu0 0.0
    %1246 = vmatpush1.xpose.msra.mxu0 0.0
    %1247 = vmatprep.subr.mxu0 0.0
    %1248 = vmatpush1.xpose.msra.mxu0 0.0
    %1249 = vmatprep.subr.mxu0 0.0
    %1250 = vmatpush1.xpose.msra.mxu0 0.0
    %1251 = vmatprep.subr.mxu0 0.0
    %1252 = vmatpush1.xpose.msra.mxu0 0.0
    %1253 = vmatprep.subr.mxu0 0.0
    %1254 = vmatpush1.xpose.msra.mxu0 0.0
    %1255 = vmatprep.subr.mxu0 0.0
    %1256 = vmatpush1.xpose.msra.mxu0 0.0
    %1257 = vmatprep.subr.mxu0 0.0
    %1258 = vmatpush1.xpose.msra.mxu0 0.0
    %1259 = vmatprep.subr.mxu0 0.0
    %1260 = vmatpush1.xpose.msra.mxu0 0.0
    %1261 = vmatprep.mubr.f32.mxu0 0.0
    %1262 = vmatmul.mubr.f32.gmra.mrb[0].mxu0 %v1193
    %v1263 = vpop.f32.mrb[0].mxu0
    %v1264 = vadd.f32 %v193, %v1263
    %v1265 = vpop.f32.mrb[0].mxu0
    %1266 = vdwg.mxu0
    %1267 = vrot.lane.b32.xlu0 %v163, 104
    %v1268 = vpop.permute.xlu0 %1267
    %1269 = vrot.lane.b32.xlu0 %v163, 72
    %v1270 = vpop.permute.xlu0 %1269
    %v1271 = vsel %vm203, %v1268, 0
    %v1273 = vsel %vm203, %v1270, 0
    %1275 = vmatprep.subr.mxu0 0.0
    %1276 = vmatpush1.xpose.msra.mxu0 %v1273
    %1277 = vmatprep.subr.mxu0 0.0
    %1278 = vmatpush1.xpose.msra.mxu0 0.0
    %1279 = vmatprep.subr.mxu0 0.0
    %1280 = vmatpush1.xpose.msra.mxu0 0.0
    %1281 = vmatprep.subr.mxu0 0.0
    %1282 = vmatpush1.xpose.msra.mxu0 0.0
    %1283 = vmatprep.subr.mxu0 0.0
    %1284 = vmatpush1.xpose.msra.mxu0 0.0
    %1285 = vmatprep.subr.mxu0 0.0
    %1286 = vmatpush1.xpose.msra.mxu0 0.0
    %1287 = vmatprep.subr.mxu0 0.0
    %1288 = vmatpush1.xpose.msra.mxu0 0.0
    %1289 = vmatprep.subr.mxu0 0.0
    %1290 = vmatpush1.xpose.msra.mxu0 0.0
    %1291 = vmatprep.subr.mxu0 0.0
    %1292 = vmatpush1.xpose.msra.mxu0 0.0
    %1293 = vmatprep.subr.mxu0 0.0
    %1294 = vmatpush1.xpose.msra.mxu0 0.0
    %1295 = vmatprep.subr.mxu0 0.0
    %1296 = vmatpush1.xpose.msra.mxu0 0.0
    %1297 = vmatprep.subr.mxu0 0.0
    %1298 = vmatpush1.xpose.msra.mxu0 0.0
    %1299 = vmatprep.subr.mxu0 0.0
    %1300 = vmatpush1.xpose.msra.mxu0 0.0
    %1301 = vmatprep.subr.mxu0 0.0
    %1302 = vmatpush1.xpose.msra.mxu0 0.0
    %1303 = vmatprep.subr.mxu0 0.0
    %1304 = vmatpush1.xpose.msra.mxu0 0.0
    %1305 = vmatprep.subr.mxu0 0.0
    %1306 = vmatpush1.xpose.msra.mxu0 0.0
    %1307 = vmatprep.subr.mxu0 0.0
    %1308 = vmatpush1.xpose.msra.mxu0 0.0
    %1309 = vmatprep.subr.mxu0 0.0
    %1310 = vmatpush1.xpose.msra.mxu0 0.0
    %1311 = vmatprep.subr.mxu0 0.0
    %1312 = vmatpush1.xpose.msra.mxu0 0.0
    %1313 = vmatprep.subr.mxu0 0.0
    %1314 = vmatpush1.xpose.msra.mxu0 0.0
    %1315 = vmatprep.subr.mxu0 0.0
    %1316 = vmatpush1.xpose.msra.mxu0 0.0
    %1317 = vmatprep.subr.mxu0 0.0
    %1318 = vmatpush1.xpose.msra.mxu0 0.0
    %1319 = vmatprep.subr.mxu0 0.0
    %1320 = vmatpush1.xpose.msra.mxu0 0.0
    %1321 = vmatprep.subr.mxu0 0.0
    %1322 = vmatpush1.xpose.msra.mxu0 0.0
    %1323 = vmatprep.subr.mxu0 0.0
    %1324 = vmatpush1.xpose.msra.mxu0 0.0
    %1325 = vmatprep.subr.mxu0 0.0
    %1326 = vmatpush1.xpose.msra.mxu0 0.0
    %1327 = vmatprep.subr.mxu0 0.0
    %1328 = vmatpush1.xpose.msra.mxu0 0.0
    %1329 = vmatprep.subr.mxu0 0.0
    %1330 = vmatpush1.xpose.msra.mxu0 0.0
    %1331 = vmatprep.subr.mxu0 0.0
    %1332 = vmatpush1.xpose.msra.mxu0 0.0
    %1333 = vmatprep.subr.mxu0 0.0
    %1334 = vmatpush1.xpose.msra.mxu0 0.0
    %1335 = vmatprep.subr.mxu0 0.0
    %1336 = vmatpush1.xpose.msra.mxu0 0.0
    %1337 = vmatprep.subr.mxu0 0.0
    %1338 = vmatpush1.xpose.msra.mxu0 0.0
    %1339 = vmatprep.mubr.f32.mxu0 0.0
    %1340 = vmatmul.mubr.f32.gmra.mrb[0].mxu0 %v1271
    %v1341 = vpop.f32.mrb[0].mxu0
    %v1342 = vadd.f32 %v197, %v1341
    %v1343 = vpop.f32.mrb[0].mxu0
    %1344 = vdwg.mxu0
    %v1345 = vsel %vm203, %v1264, -inf
    %1346 = vmax.xlane.f32.xlu0 %v1345
    %v1347 = vpop.xlane.xlu0 %1346
    %v1348 = vsel %vm203, %v1342, -inf
    %1349 = vmax.xlane.f32.xlu0 %v1348
    %v1350 = vpop.xlane.xlu0 %1349
    %v1351 = vsub.f32 %v1264, %v1347
    %v1352 = vsub.f32 %v1342, %v1350
    %v1353 = vmul.f32 %v1351, 1.442695
    %v1354 = vpow.pop %v1353
    %v1355 = vmul.f32 %v1352, 1.442695
    %v1356 = vpow.pop %v1355
    %v1357 = vsel %vm203, %v1354, 0.0
    %1358 = vadd.xlane.f32.xlu0 %v1357
    %v1359 = vpop.xlane.xlu0 %1358
    %v1360 = vsel %vm203, %v1356, 0.0
    %1361 = vadd.xlane.f32.xlu0 %v1360
    %v1362 = vpop.xlane.xlu0 %1361
    %v1363 = vrcp.pop %v1359
    %v1364 = vrcp.pop %v1362
    %v1365 = vmul.f32 %v1354, %v1363
    %v1366 = vmul.f32 %v1356, %v1364
    %1367 = vrot.lane.b32.xlu0 %v158, 40
    %v1368 = vpop.permute.xlu0 %1367
    %v1371 = vsel %vm203, %v1365, 0
    %1373 = vmatprep.subr.mxu0 0.0
    %1374 = vmatpush1.msra.mxu0 %v1368
    %1375 = vmatprep.subr.mxu0 0.0
    %1376 = vmatpush1.msra.mxu0 0.0
    %1377 = vmatprep.subr.mxu0 0.0
    %1378 = vmatpush1.msra.mxu0 0.0
    %1379 = vmatprep.subr.mxu0 0.0
    %1380 = vmatpush1.msra.mxu0 0.0
    %1381 = vmatprep.subr.mxu0 0.0
    %1382 = vmatpush1.msra.mxu0 0.0
    %1383 = vmatprep.subr.mxu0 0.0
    %1384 = vmatpush1.msra.mxu0 0.0
    %1385 = vmatprep.subr.mxu0 0.0
    %1386 = vmatpush1.msra.mxu0 0.0
    %1387 = vmatprep.subr.mxu0 0.0
    %1388 = vmatpush1.msra.mxu0 0.0
    %1389 = vmatprep.subr.mxu0 0.0
    %1390 = vmatpush1.msra.mxu0 0.0
    %1391 = vmatprep.subr.mxu0 0.0
    %1392 = vmatpush1.msra.mxu0 0.0
    %1393 = vmatprep.subr.mxu0 0.0
    %1394 = vmatpush1.msra.mxu0 0.0
    %1395 = vmatprep.subr.mxu0 0.0
    %1396 = vmatpush1.msra.mxu0 0.0
    %1397 = vmatprep.subr.mxu0 0.0
    %1398 = vmatpush1.msra.mxu0 0.0
    %1399 = vmatprep.subr.mxu0 0.0
    %1400 = vmatpush1.msra.mxu0 0.0
    %1401 = vmatprep.subr.mxu0 0.0
    %1402 = vmatpush1.msra.mxu0 0.0
    %1403 = vmatprep.subr.mxu0 0.0
    %1404 = vmatpush1.msra.mxu0 0.0
    %1405 = vmatprep.subr.mxu0 0.0
    %1406 = vmatpush1.msra.mxu0 0.0
    %1407 = vmatprep.subr.mxu0 0.0
    %1408 = vmatpush1.msra.mxu0 0.0
    %1409 = vmatprep.subr.mxu0 0.0
    %1410 = vmatpush1.msra.mxu0 0.0
    %1411 = vmatprep.subr.mxu0 0.0
    %1412 = vmatpush1.msra.mxu0 0.0
    %1413 = vmatprep.subr.mxu0 0.0
    %1414 = vmatpush1.msra.mxu0 0.0
    %1415 = vmatprep.subr.mxu0 0.0
    %1416 = vmatpush1.msra.mxu0 0.0
    %1417 = vmatprep.subr.mxu0 0.0
    %1418 = vmatpush1.msra.mxu0 0.0
    %1419 = vmatprep.subr.mxu0 0.0
    %1420 = vmatpush1.msra.mxu0 0.0
    %1421 = vmatprep.subr.mxu0 0.0
    %1422 = vmatpush1.msra.mxu0 0.0
    %1423 = vmatprep.subr.mxu0 0.0
    %1424 = vmatpush1.msra.mxu0 0.0
    %1425 = vmatprep.subr.mxu0 0.0
    %1426 = vmatpush1.msra.mxu0 0.0
    %1427 = vmatprep.subr.mxu0 0.0
    %1428 = vmatpush1.msra.mxu0 0.0
    %1429 = vmatprep.subr.mxu0 0.0
    %1430 = vmatpush1.msra.mxu0 0.0
    %1431 = vmatprep.subr.mxu0 0.0
    %1432 = vmatpush1.msra.mxu0 0.0
    %1433 = vmatprep.subr.mxu0 0.0
    %1434 = vmatpush1.msra.mxu0 0.0
    %1435 = vmatprep.subr.mxu0 0.0
    %1436 = vmatpush1.msra.mxu0 0.0
    %1437 = vmatprep.mubr.f32.mxu0 0.0
    %1438 = vmatmul.mubr.f32.gmra.mrb[0].mxu0 %v1371
    %v1439 = vpop.f32.mrb[0].mxu0
    %v1440 = vadd.f32 0.0, %v1439
    %v1441 = vpop.f32.mrb[0].mxu0
    %1442 = vdwg.mxu0
    %1443 = vrot.lane.b32.xlu0 %v163, 40
    %v1444 = vpop.permute.xlu0 %1443
    %v1447 = vsel %vm203, %v1366, 0
    %1449 = vmatprep.subr.mxu0 0.0
    %1450 = vmatpush1.msra.mxu0 %v1444
    %1451 = vmatprep.subr.mxu0 0.0
    %1452 = vmatpush1.msra.mxu0 0.0
    %1453 = vmatprep.subr.mxu0 0.0
    %1454 = vmatpush1.msra.mxu0 0.0
    %1455 = vmatprep.subr.mxu0 0.0
    %1456 = vmatpush1.msra.mxu0 0.0
    %1457 = vmatprep.subr.mxu0 0.0
    %1458 = vmatpush1.msra.mxu0 0.0
    %1459 = vmatprep.subr.mxu0 0.0
    %1460 = vmatpush1.msra.mxu0 0.0
    %1461 = vmatprep.subr.mxu0 0.0
    %1462 = vmatpush1.msra.mxu0 0.0
    %1463 = vmatprep.subr.mxu0 0.0
    %1464 = vmatpush1.msra.mxu0 0.0
    %1465 = vmatprep.subr.mxu0 0.0
    %1466 = vmatpush1.msra.mxu0 0.0
    %1467 = vmatprep.subr.mxu0 0.0
    %1468 = vmatpush1.msra.mxu0 0.0
    %1469 = vmatprep.subr.mxu0 0.0
    %1470 = vmatpush1.msra.mxu0 0.0
    %1471 = vmatprep.subr.mxu0 0.0
    %1472 = vmatpush1.msra.mxu0 0.0
    %1473 = vmatprep.subr.mxu0 0.0
    %1474 = vmatpush1.msra.mxu0 0.0
    %1475 = vmatprep.subr.mxu0 0.0
    %1476 = vmatpush1.msra.mxu0 0.0
    %1477 = vmatprep.subr.mxu0 0.0
    %1478 = vmatpush1.msra.mxu0 0.0
    %1479 = vmatprep.subr.mxu0 0.0
    %1480 = vmatpush1.msra.mxu0 0.0
    %1481 = vmatprep.subr.mxu0 0.0
    %1482 = vmatpush1.msra.mxu0 0.0
    %1483 = vmatprep.subr.mxu0 0.0
    %1484 = vmatpush1.msra.mxu0 0.0
    %1485 = vmatprep.subr.mxu0 0.0
    %1486 = vmatpush1.msra.mxu0 0.0
    %1487 = vmatprep.subr.mxu0 0.0
    %1488 = vmatpush1.msra.mxu0 0.0
    %1489 = vmatprep.subr.mxu0 0.0
    %1490 = vmatpush1.msra.mxu0 0.0
    %1491 = vmatprep.subr.mxu0 0.0
    %1492 = vmatpush1.msra.mxu0 0.0
    %1493 = vmatprep.subr.mxu0 0.0
    %1494 = vmatpush1.msra.mxu0 0.0
    %1495 = vmatprep.subr.mxu0 0.0
    %1496 = vmatpush1.msra.mxu0 0.0
    %1497 = vmatprep.subr.mxu0 0.0
    %1498 = vmatpush1.msra.mxu0 0.0
    %1499 = vmatprep.subr.mxu0 0.0
    %1500 = vmatpush1.msra.mxu0 0.0
    %1501 = vmatprep.subr.mxu0 0.0
    %1502 = vmatpush1.msra.mxu0 0.0
    %1503 = vmatprep.subr.mxu0 0.0
    %1504 = vmatpush1.msra.mxu0 0.0
    %1505 = vmatprep.subr.mxu0 0.0
    %1506 = vmatpush1.msra.mxu0 0.0
    %1507 = vmatprep.subr.mxu0 0.0
    %1508 = vmatpush1.msra.mxu0 0.0
    %1509 = vmatprep.subr.mxu0 0.0
    %1510 = vmatpush1.msra.mxu0 0.0
    %1511 = vmatprep.subr.mxu0 0.0
    %1512 = vmatpush1.msra.mxu0 0.0
    %1513 = vmatprep.mubr.f32.mxu0 0.0
    %1514 = vmatmul.mubr.f32.gmra.mrb[0].mxu0 %v1447
    %v1515 = vpop.f32.mrb[0].mxu0
    %v1516 = vadd.f32 0.0, %v1515
    %v1517 = vpop.f32.mrb[0].mxu0
    %1518 = vdwg.mxu0
    %1521 = vrot.lane.b32.xlu0 %v780, 8
    %v1522 = vpop.permute.xlu0 %1521
    %1523 = vrot.lane.b32.xlu0 %v856, 8
    %v1524 = vpop.permute.xlu0 %1523
    %1529 = vrot.lane.b32.xlu0 %v1110, 16
    %v1530 = vpop.permute.xlu0 %1529
    %1531 = vrot.lane.b32.xlu0 %v1186, 16
    %v1532 = vpop.permute.xlu0 %1531
    %1537 = vrot.lane.b32.xlu0 %v1440, 24
    %v1538 = vpop.permute.xlu0 %1537
    %1539 = vrot.lane.b32.xlu0 %v1516, 24
    %v1540 = vpop.permute.xlu0 %1539
    %v1543 = vsel %vm203, %v450, %v1522
    %v1544 = vsel %vm203, %v526, %v1524
    %vm1545 = vcmask 130048
    %v1546 = vsel %vm1545, %v1543, %v1530
    %v1547 = vsel %vm1545, %v1544, %v1532
    %vm1548 = vcmask 195584
    %v1549 = vsel %vm1548, %v1546, %v1538
    %v1550 = vsel %vm1548, %v1547, %v1540
    %1555 = vrot.lane.b32.xlu0 %v27, 32
    %v1556 = vpop.permute.xlu0 %1555
    %1557 = vrot.lane.b32.xlu0 %v28, 32
    %v1558 = vpop.permute.xlu0 %1557
    %1559 = vrot.lane.b32.xlu0 %v29, 32
    %v1560 = vpop.permute.xlu0 %1559
    %1561 = vrot.lane.b32.xlu0 %v30, 32
    %v1562 = vpop.permute.xlu0 %1561
    %v1568 = vsel %vm31, %v1549, 0
    %v1571 = vsel %vm31, %v1550, 0
    %1573 = vmatprep.subr.mxu0 0.0
    %1574 = vmatpush1.msra.mxu0 %v1556
    %1575 = vmatprep.subr.mxu0 0.0
    %1576 = vmatpush1.msra.mxu0 %v1558
    %1577 = vmatprep.subr.mxu0 0.0
    %1578 = vmatpush1.msra.mxu0 %v1560
    %1579 = vmatprep.subr.mxu0 0.0
    %1580 = vmatpush1.msra.mxu0 %v1562
    %1581 = vmatprep.subr.mxu0 0.0
    %1582 = vmatpush1.msra.mxu0 0.0
    %1583 = vmatprep.subr.mxu0 0.0
    %1584 = vmatpush1.msra.mxu0 0.0
    %1585 = vmatprep.subr.mxu0 0.0
    %1586 = vmatpush1.msra.mxu0 0.0
    %1587 = vmatprep.subr.mxu0 0.0
    %1588 = vmatpush1.msra.mxu0 0.0
    %1589 = vmatprep.subr.mxu0 0.0
    %1590 = vmatpush1.msra.mxu0 0.0
    %1591 = vmatprep.subr.mxu0 0.0
    %1592 = vmatpush1.msra.mxu0 0.0
    %1593 = vmatprep.subr.mxu0 0.0
    %1594 = vmatpush1.msra.mxu0 0.0
    %1595 = vmatprep.subr.mxu0 0.0
    %1596 = vmatpush1.msra.mxu0 0.0
    %1597 = vmatprep.subr.mxu0 0.0
    %1598 = vmatpush1.msra.mxu0 0.0
    %1599 = vmatprep.subr.mxu0 0.0
    %1600 = vmatpush1.msra.mxu0 0.0
    %1601 = vmatprep.subr.mxu0 0.0
    %1602 = vmatpush1.msra.mxu0 0.0
    %1603 = vmatprep.subr.mxu0 0.0
    %1604 = vmatpush1.msra.mxu0 0.0
    %1605 = vmatprep.subr.mxu0 0.0
    %1606 = vmatpush1.msra.mxu0 0.0
    %1607 = vmatprep.subr.mxu0 0.0
    %1608 = vmatpush1.msra.mxu0 0.0
    %1609 = vmatprep.subr.mxu0 0.0
    %1610 = vmatpush1.msra.mxu0 0.0
    %1611 = vmatprep.subr.mxu0 0.0
    %1612 = vmatpush1.msra.mxu0 0.0
    %1613 = vmatprep.subr.mxu0 0.0
    %1614 = vmatpush1.msra.mxu0 0.0
    %1615 = vmatprep.subr.mxu0 0.0
    %1616 = vmatpush1.msra.mxu0 0.0
    %1617 = vmatprep.subr.mxu0 0.0
    %1618 = vmatpush1.msra.mxu0 0.0
    %1619 = vmatprep.subr.mxu0 0.0
    %1620 = vmatpush1.msra.mxu0 0.0
    %1621 = vmatprep.subr.mxu0 0.0
    %1622 = vmatpush1.msra.mxu0 0.0
    %1623 = vmatprep.subr.mxu0 0.0
    %1624 = vmatpush1.msra.mxu0 0.0
    %1625 = vmatprep.subr.mxu0 0.0
    %1626 = vmatpush1.msra.mxu0 0.0
    %1627 = vmatprep.subr.mxu0 0.0
    %1628 = vmatpush1.msra.mxu0 0.0
    %1629 = vmatprep.subr.mxu0 0.0
    %1630 = vmatpush1.msra.mxu0 0.0
    %1631 = vmatprep.subr.mxu0 0.0
    %1632 = vmatpush1.msra.mxu0 0.0
    %1633 = vmatprep.subr.mxu0 0.0
    %1634 = vmatpush1.msra.mxu0 0.0
    %1635 = vmatprep.subr.mxu0 0.0
    %1636 = vmatpush1.msra.mxu0 0.0
    %1637 = vmatprep.mubr.f32.mxu0 0.0
    %1638 = vmatmul.mubr.f32.gmra.mrb[0].mxu0 %v1568
    %v1639 = vpop.f32.mrb[0].mxu0
    %v1640 = vadd.f32 0.0, %v1639
    %v1641 = vpop.f32.mrb[0].mxu0
    %1642 = vmatprep.mubr.f32.mxu0 0.0
    %1643 = vmatmul.mubr.f32.gmra.mrb[0].mxu0 %v1571
    %v1644 = vpop.f32.mrb[0].mxu0
    %v1645 = vadd.f32 0.0, %v1644
    %v1646 = vpop.f32.mrb[0].mxu0
    %1647 = vdwg.mxu0
    %v1648 = vadd.f32 %v24, %v1640
    %v1649 = vadd.f32 %v25, %v1645
    %v1650 = vsel %vm31, %v1648, 0.0
    %1651 = vadd.xlane.f32.xlu0 %v1650
    %v1652 = vpop.xlane.xlu0 %1651
    %v1653 = vsel %vm31, %v1649, 0.0
    %1654 = vadd.xlane.f32.xlu0 %v1653
    %v1655 = vpop.xlane.xlu0 %1654
    %v1656 = vmul.f32 %v1652, %v38
    %v1657 = vmul.f32 %v1655, %v38
    %v1658 = vsub.f32 %v1648, %v1656
    %v1659 = vsub.f32 %v1649, %v1657
    %v1660 = vmul.f32 %v1658, %v1658
    %v1661 = vmul.f32 %v1659, %v1659
    %v1662 = vsel %vm31, %v1660, 0.0
    %1663 = vadd.xlane.f32.xlu0 %v1662
    %v1664 = vpop.xlane.xlu0 %1663
    %v1665 = vsel %vm31, %v1661, 0.0
    %1666 = vadd.xlane.f32.xlu0 %v1665
    %v1667 = vpop.xlane.xlu0 %1666
    %v1668 = vmul.f32 %v1664, 0.032258064
    %v1669 = vmul.f32 %v1667, 0.032258064
    %v1670 = vrsqrt.pop %v1668
    %v1671 = vmul.f32 %v1668, %v1670
    %vm1672 = vcmp.eq.f32.partialorder %v1668, inf
    %v1673 = vsel %vm1672, %v1668, %v1671
    %vm1674 = vcmp.eq.f32.partialorder %v1668, 0.0
    %v1675 = vand.u32 %v1668, 2147483648
    %v1676 = vsel %vm1674, %v1675, %v1673
    %v1677 = vrsqrt.pop %v1669
    %v1678 = vmul.f32 %v1669, %v1677
    %vm1679 = vcmp.eq.f32.partialorder %v1669, inf
    %v1680 = vsel %vm1679, %v1669, %v1678
    %vm1681 = vcmp.eq.f32.partialorder %v1669, 0.0
    %v1682 = vand.u32 %v1669, 2147483648
    %v1683 = vsel %vm1681, %v1682, %v1680
    %v1684 = vadd.f32 %v1676, 1e-06
    %v1685 = vadd.f32 %v1683, 1e-06
    %v1686 = vrcp.pop %v1684
    %v1687 = vrcp.pop %v1685
    %1690 = vrot.lane.b32.xlu0 %v1658, 64
    %v1691 = vpop.permute.xlu0 %1690
    %1692 = vrot.lane.b32.xlu0 %v1659, 64
    %v1693 = vpop.permute.xlu0 %1692
    %v1696 = vmul.f32 %v74, %v1691
    %v1697 = vmul.f32 %v74, %v1693
    %v1698 = vmul.f32 %v1696, %v1686
    %v1699 = vmul.f32 %v1697, %v1687
    %v1700 = vadd.f32 %v1698, %v81
    %v1701 = vadd.f32 %v1699, %v81
    %v1702 = vld [vmem:[%s3] sm:$0xff]
    %v1703 = vld [vmem:[%s3 + $0x8] sm:$0xff]
    %v1704 = vld [vmem:[%s3 + $0x10] sm:$0xff]
    %v1705 = vld [vmem:[%s3 + $0x18] sm:$0xff]
    %v1706 = vlaneseq
    %v1707 = vshrl.u32 %v1706, 7
    %v1708 = vsub.s32 1, %v1707
    %v1709 = vrot.slane %v26, %v1708
    %1712 = vrot.lane.b32.xlu0 %v1700, 64
    %v1713 = vpop.permute.xlu0 %1712
    %1714 = vrot.lane.b32.xlu0 %v1701, 64
    %v1715 = vpop.permute.xlu0 %1714
    %v1716 = vsel %vm31, %v1713, 0
    %v1718 = vsel %vm31, %v1715, 0
    %1720 = vmatprep.subr.mxu0 0.0
    %1721 = vmatpush1.msra.mxu0 %v1702
    %1722 = vmatprep.subr.mxu0 0.0
    %1723 = vmatpush1.msra.mxu0 %v1703
    %1724 = vmatprep.subr.mxu0 0.0
    %1725 = vmatpush1.msra.mxu0 %v1704
    %1726 = vmatprep.subr.mxu0 0.0
    %1727 = vmatpush1.msra.mxu0 %v1705
    %1728 = vmatprep.subr.mxu0 0.0
    %1729 = vmatpush1.msra.mxu0 0.0
    %1730 = vmatprep.subr.mxu0 0.0
    %1731 = vmatpush1.msra.mxu0 0.0
    %1732 = vmatprep.subr.mxu0 0.0
    %1733 = vmatpush1.msra.mxu0 0.0
    %1734 = vmatprep.subr.mxu0 0.0
    %1735 = vmatpush1.msra.mxu0 0.0
    %1736 = vmatprep.subr.mxu0 0.0
    %1737 = vmatpush1.msra.mxu0 0.0
    %1738 = vmatprep.subr.mxu0 0.0
    %1739 = vmatpush1.msra.mxu0 0.0
    %1740 = vmatprep.subr.mxu0 0.0
    %1741 = vmatpush1.msra.mxu0 0.0
    %1742 = vmatprep.subr.mxu0 0.0
    %1743 = vmatpush1.msra.mxu0 0.0
    %1744 = vmatprep.subr.mxu0 0.0
    %1745 = vmatpush1.msra.mxu0 0.0
    %1746 = vmatprep.subr.mxu0 0.0
    %1747 = vmatpush1.msra.mxu0 0.0
    %1748 = vmatprep.subr.mxu0 0.0
    %1749 = vmatpush1.msra.mxu0 0.0
    %1750 = vmatprep.subr.mxu0 0.0
    %1751 = vmatpush1.msra.mxu0 0.0
    %1752 = vmatprep.subr.mxu0 0.0
    %1753 = vmatpush1.msra.mxu0 0.0
    %1754 = vmatprep.subr.mxu0 0.0
    %1755 = vmatpush1.msra.mxu0 0.0
    %1756 = vmatprep.subr.mxu0 0.0
    %1757 = vmatpush1.msra.mxu0 0.0
    %1758 = vmatprep.subr.mxu0 0.0
    %1759 = vmatpush1.msra.mxu0 0.0
    %1760 = vmatprep.subr.mxu0 0.0
    %1761 = vmatpush1.msra.mxu0 0.0
    %1762 = vmatprep.subr.mxu0 0.0
    %1763 = vmatpush1.msra.mxu0 0.0
    %1764 = vmatprep.subr.mxu0 0.0
    %1765 = vmatpush1.msra.mxu0 0.0
    %1766 = vmatprep.subr.mxu0 0.0
    %1767 = vmatpush1.msra.mxu0 0.0
    %1768 = vmatprep.subr.mxu0 0.0
    %1769 = vmatpush1.msra.mxu0 0.0
    %1770 = vmatprep.subr.mxu0 0.0
    %1771 = vmatpush1.msra.mxu0 0.0
    %1772 = vmatprep.subr.mxu0 0.0
    %1773 = vmatpush1.msra.mxu0 0.0
    %1774 = vmatprep.subr.mxu0 0.0
    %1775 = vmatpush1.msra.mxu0 0.0
    %1776 = vmatprep.subr.mxu0 0.0
    %1777 = vmatpush1.msra.mxu0 0.0
    %1778 = vmatprep.subr.mxu0 0.0
    %1779 = vmatpush1.msra.mxu0 0.0
    %1780 = vmatprep.subr.mxu0 0.0
    %1781 = vmatpush1.msra.mxu0 0.0
    %1782 = vmatprep.subr.mxu0 0.0
    %1783 = vmatpush1.msra.mxu0 0.0
    %1784 = vmatprep.mubr.f32.mxu0 0.0
    %1785 = vmatmul.mubr.f32.gmra.mrb[0].mxu0 %v1716
    %v1786 = vpop.f32.mrb[0].mxu0
    %v1787 = vadd.f32 %v1709, %v1786
    %v1788 = vpop.f32.mrb[0].mxu0
    %1789 = vmatprep.mubr.f32.mxu0 0.0
    %1790 = vmatmul.mubr.f32.gmra.mrb[0].mxu0 %v1718
    %v1791 = vpop.f32.mrb[0].mxu0
    %v1792 = vadd.f32 %v1709, %v1791
    %v1793 = vpop.f32.mrb[0].mxu0
    %1794 = vdwg.mxu0
    %v1795 = vmax.f32 %v1787, 0.0
    %v1796 = vmax.f32 %v1792, 0.0
    %v1797 = vld [vmem:[%s4] sm:$0xff]
    %v1798 = vld [vmem:[%s4 + $0x8] sm:$0xff]
    %v1799 = vld [vmem:[%s4 + $0x10] sm:$0xff]
    %v1800 = vld [vmem:[%s4 + $0x18] sm:$0xff]
    %v1801 = vld [vmem:[%s4 + $0x20] sm:$0xff]
    %v1802 = vld [vmem:[%s4 + $0x28] sm:$0xff]
    %v1803 = vld [vmem:[%s4 + $0x30] sm:$0xff]
    %v1804 = vld [vmem:[%s4 + $0x38] sm:$0xff]
    %1806 = vrot.lane.b32.xlu0 %v1709, 64
    %v1807 = vpop.permute.xlu0 %1806
    %vm1809 = vcmask 523264
    %v1811 = vsel %vm1809, %v1795, 0
    %v1814 = vsel %vm1809, %v1796, 0
    %1816 = vmatprep.subr.mxu0 0.0
    %1817 = vmatpush1.msra.mxu0 %v1797
    %1818 = vmatprep.subr.mxu0 0.0
    %1819 = vmatpush1.msra.mxu0 %v1798
    %1820 = vmatprep.subr.mxu0 0.0
    %1821 = vmatpush1.msra.mxu0 %v1799
    %1822 = vmatprep.subr.mxu0 0.0
    %1823 = vmatpush1.msra.mxu0 %v1800
    %1824 = vmatprep.subr.mxu0 0.0
    %1825 = vmatpush1.msra.mxu0 %v1801
    %1826 = vmatprep.subr.mxu0 0.0
    %1827 = vmatpush1.msra.mxu0 %v1802
    %1828 = vmatprep.subr.mxu0 0.0
    %1829 = vmatpush1.msra.mxu0 %v1803
    %1830 = vmatprep.subr.mxu0 0.0
    %1831 = vmatpush1.msra.mxu0 %v1804
    %1832 = vmatprep.subr.mxu0 0.0
    %1833 = vmatpush1.msra.mxu0 0.0
    %1834 = vmatprep.subr.mxu0 0.0
    %1835 = vmatpush1.msra.mxu0 0.0
    %1836 = vmatprep.subr.mxu0 0.0
    %1837 = vmatpush1.msra.mxu0 0.0
    %1838 = vmatprep.subr.mxu0 0.0
    %1839 = vmatpush1.msra.mxu0 0.0
    %1840 = vmatprep.subr.mxu0 0.0
    %1841 = vmatpush1.msra.mxu0 0.0
    %1842 = vmatprep.subr.mxu0 0.0
    %1843 = vmatpush1.msra.mxu0 0.0
    %1844 = vmatprep.subr.mxu0 0.0
    %1845 = vmatpush1.msra.mxu0 0.0
    %1846 = vmatprep.subr.mxu0 0.0
    %1847 = vmatpush1.msra.mxu0 0.0
    %1848 = vmatprep.subr.mxu0 0.0
    %1849 = vmatpush1.msra.mxu0 0.0
    %1850 = vmatprep.subr.mxu0 0.0
    %1851 = vmatpush1.msra.mxu0 0.0
    %1852 = vmatprep.subr.mxu0 0.0
    %1853 = vmatpush1.msra.mxu0 0.0
    %1854 = vmatprep.subr.mxu0 0.0
    %1855 = vmatpush1.msra.mxu0 0.0
    %1856 = vmatprep.subr.mxu0 0.0
    %1857 = vmatpush1.msra.mxu0 0.0
    %1858 = vmatprep.subr.mxu0 0.0
    %1859 = vmatpush1.msra.mxu0 0.0
    %1860 = vmatprep.subr.mxu0 0.0
    %1861 = vmatpush1.msra.mxu0 0.0
    %1862 = vmatprep.subr.mxu0 0.0
    %1863 = vmatpush1.msra.mxu0 0.0
    %1864 = vmatprep.subr.mxu0 0.0
    %1865 = vmatpush1.msra.mxu0 0.0
    %1866 = vmatprep.subr.mxu0 0.0
    %1867 = vmatpush1.msra.mxu0 0.0
    %1868 = vmatprep.subr.mxu0 0.0
    %1869 = vmatpush1.msra.mxu0 0.0
    %1870 = vmatprep.subr.mxu0 0.0
    %1871 = vmatpush1.msra.mxu0 0.0
    %1872 = vmatprep.subr.mxu0 0.0
    %1873 = vmatpush1.msra.mxu0 0.0
    %1874 = vmatprep.subr.mxu0 0.0
    %1875 = vmatpush1.msra.mxu0 0.0
    %1876 = vmatprep.subr.mxu0 0.0
    %1877 = vmatpush1.msra.mxu0 0.0
    %1878 = vmatprep.subr.mxu0 0.0
    %1879 = vmatpush1.msra.mxu0 0.0
    %1880 = vmatprep.mubr.f32.mxu0 0.0
    %1881 = vmatmul.mubr.f32.gmra.mrb[0].mxu0 %v1811
    %v1882 = vpop.f32.mrb[0].mxu0
    %v1883 = vadd.f32 %v1807, %v1882
    %v1884 = vpop.f32.mrb[0].mxu0
    %1885 = vmatprep.mubr.f32.mxu0 0.0
    %1886 = vmatmul.mubr.f32.gmra.mrb[0].mxu0 %v1814
    %v1887 = vpop.f32.mrb[0].mxu0
    %v1888 = vadd.f32 %v1807, %v1887
    %v1889 = vpop.f32.mrb[0].mxu0
    %1890 = vdwg.mxu0
    %v1891 = vadd.f32 %v1648, %v1883
    %v1892 = vadd.f32 %v1649, %v1888
    %1893 = vst.msk [vmem:[#allocation2] sm:$0xff] %vm31, %v1891
    %1894 = vst.msk [vmem:[#allocation2 + $0x8] sm:$0xff] %vm31, %v1892
    // Predicated region
    $region26: #{encoder_block.1} parent=1 // pred_check
      _
    $region27: #{encoder_block.1} parent=1 // pred_check_branch
      %1896 = sbr.rel (0) target = $region29
    $region28: #{encoder_block.1} parent=1 // pred_region
      %s1898 = ssub.s32 256, 256
      %1899 = vsyncadd [#allocation3], %s1898
      %s1900 = sshll.u32 [#allocation2], 4
      %s1901 = int_to_ptr.vmem [resolvable:$true] %s1900
      %1906 = dma.vmem_to_hbm [thread:$0]  %s1901, 256, %s6, [#allocation3], 128, 128, 8
    $region29: #{encoder_block.1} parent=1 // pred_fallthru
      _
    // Predicated region
    $region30: #{encoder_block.1} parent=1 // pred_check
      _
    $region31: #{encoder_block.1} parent=1 // pred_check_branch
      %1908 = sbr.rel (0) target = $region33
    $region32: #{encoder_block.1} parent=1 // pred_region
      %1909 = dma.done [#allocation3], 256
    $region33: #{encoder_block.1} parent=1 // pred_fallthru
      _
    %1910 = vsyncpa [#allocation3], 1

</llo_original>
